<compile_context>
chip_gen: v6e
topology: v6e:2x2x1
jax: 0.10.0
libtpu: 0.0.40
codegen_flags: <defaults>
</compile_context>

<pallas_src>
import functools

import jax
import jax.numpy as jnp
from jax.experimental import pallas as pl
from jax.experimental.pallas import tpu as pltpu


def _mlp_kernel(x_ref,
                w1_ref, b1_ref,
                w2_ref, b2_ref,
                w3_ref, b3_ref,
                w4_ref, b4_ref,
                o_ref, *, bf16_tanh):
    # x_ref: (tile, in) f32 ; w1..w3: bf16 (in,out) ; b1..b3: f32 (1,out)
    # w4_ref: (1, 128) f32 lane-dense row ; b4_ref: (1, 1) f32
    act_dtype = jnp.bfloat16 if bf16_tanh else jnp.float32

    # In-kernel cast: hidden under MXU/EUP work instead of a wrapper HLO.
    x = x_ref[...].astype(jnp.bfloat16)

    h = jnp.dot(x, w1_ref[...], preferred_element_type=jnp.float32) + b1_ref[...]
    h = jnp.tanh(h.astype(act_dtype))

    h = jnp.dot(h.astype(jnp.bfloat16), w2_ref[...],
                preferred_element_type=jnp.float32) + b2_ref[...]
    h = jnp.tanh(h.astype(act_dtype))

    h = jnp.dot(h.astype(jnp.bfloat16), w3_ref[...],
                preferred_element_type=jnp.float32) + b3_ref[...]
    h = jnp.tanh(h.astype(act_dtype))

    # fc4 has N=1: VPU broadcast-multiply with the 128-wide weight row + XLU
    # lane reduction (f32), instead of a nearly-empty MXU matmul.
    out = jnp.sum(h.astype(jnp.float32) * w4_ref[...],
                  axis=-1, keepdims=True) + b4_ref[...]
    o_ref[...] = out.astype(o_ref.dtype)


def _round_up(n, m):
    return ((n + m - 1) // m) * m


def _choose_tile(B, requested):
    """Pick a batch tile: multiple of 128, <= requested, and >= 2 grid steps
    whenever B > 128 so both v7x TensorCores get work."""
    if B <= 256:
        if B > 128:
            return 128                      # -> 2 grid steps
        return B                            # block == full dim: always legal
    tile = max(128, (min(int(requested), B) // 128) * 128)
    if pl.cdiv(B, tile) < 2:                # guarantee >= 2 steps (megacore)
        tile = max(128, _round_up(pl.cdiv(B, 2), 128))
    return tile


def prepare_params(params):
    """One-time conversion to kernel-ready dtypes/layouts (hoists per-call
    casts out of the forward path)."""
    return {
        "w1": jnp.asarray(params["w1"], jnp.bfloat16),
        "b1": jnp.asarray(params["b1"], jnp.float32).reshape(1, -1),
        "w2": jnp.asarray(params["w2"], jnp.bfloat16),
        "b2": jnp.asarray(params["b2"], jnp.float32).reshape(1, -1),
        "w3": jnp.asarray(params["w3"], jnp.bfloat16),
        "b3": jnp.asarray(params["b3"], jnp.float32).reshape(1, -1),
        "w4": jnp.asarray(params["w4"], jnp.float32).reshape(1, -1),  # (1, 128)
        "b4": jnp.asarray(params["b4"], jnp.float32).reshape(1, 1),
    }


@functools.partial(jax.jit, static_argnames=("batch_tile", "bf16_tanh"))
def nn_forward(x, params, batch_tile=512, bf16_tanh=True):
    """Fused Pallas TPU forward pass.

    x: (B, input_size) float32
    params: output of prepare_params()
    batch_tile: rows per grid step (256-512 on v5e, 512-1024 on v6e, ~512 on
        v7x).  The effective tile is clamped so any batch size works and the
        grid has >= 2 steps when B > 128.
    bf16_tanh: compute tanh in bf16 (recommended on v6e/v7x; set False on v5e).
    """
    B, in_size = x.shape

    w1, b1 = params["w1"], params["b1"]
    w2, b2 = params["w2"], params["b2"]
    w3, b3 = params["w3"], params["b3"]
    w4, b4 = params["w4"], params["b4"]

    tile = _choose_tile(B, batch_tile)
    grid = (pl.cdiv(B, tile),)              # ragged last block handled by Pallas

    def full(shape):
        # Grid-invariant full-array block, resident in VMEM for every step.
        return pl.BlockSpec(shape, lambda i: (0, 0))

    kernel = functools.partial(_mlp_kernel, bf16_tanh=bf16_tanh)

    out = pl.pallas_call(
        kernel,
        out_shape=jax.ShapeDtypeStruct((B, 1), jnp.float32),
        grid_spec=pltpu.PrefetchScalarGridSpec(
            num_scalar_prefetch=0,
            grid=grid,
            in_specs=[
                pl.BlockSpec((tile, in_size), lambda i: (i, 0)),   # x tile (f32)
                full(w1.shape), full(b1.shape),
                full(w2.shape), full(b2.shape),
                full(w3.shape), full(b3.shape),
                full(w4.shape), full(b4.shape),
            ],
            out_specs=pl.BlockSpec((tile, 1), lambda i: (i, 0)),
        ),
        compiler_params=pltpu.CompilerParams(
            # Batch tiles are independent -> shard grid across TensorCores.
            dimension_semantics=("parallel",),
            # Even at tile=1024 the resident weights (<1 MiB bf16) + f32
            # intermediates (~2 MiB) are far under this; explicit so large
            # tiles never trip the scoped-VMEM defaults (16/32 MiB).
            vmem_limit_bytes=32 * 1024 * 1024,
        ),
    )(x, w1, b1, w2, b2, w3, b3, w4, b4)

    return out


def init_params(key, input_size):
    """Deterministic init matching nn.Linear's U(-1/sqrt(fan_in), 1/sqrt(fan_in))."""
    sizes = [(input_size, 512), (512, 256), (256, 128), (128, 1)]
    params = {}
    keys = jax.random.split(key, 2 * len(sizes))
    for idx, (fan_in, fan_out) in enumerate(sizes):
        bound = 1.0 / jnp.sqrt(jnp.float32(fan_in))
        w = jax.random.uniform(keys[2 * idx], (fan_in, fan_out),
                               minval=-bound, maxval=bound, dtype=jnp.float32)
        b = jax.random.uniform(keys[2 * idx + 1], (1, fan_out),
                               minval=-bound, maxval=bound, dtype=jnp.float32)
        params[f"w{idx + 1}"] = w
        params[f"b{idx + 1}"] = b
    return params


def reference_forward_f32(x, params):
    """Pure-f32 semantic reference (matches the PyTorch module)."""
    h = jnp.tanh(x @ params["w1"] + params["b1"])
    h = jnp.tanh(h @ params["w2"] + params["b2"])
    h = jnp.tanh(h @ params["w3"] + params["b3"])
    return h @ params["w4"] + params["b4"]


def reference_forward_matched(x, params):
    """Same bf16-weight / f32-accumulate / bf16-tanh numerics as the kernel."""
    h = jnp.dot(x.astype(jnp.bfloat16), params["w1"].astype(jnp.bfloat16),
                preferred_element_type=jnp.float32) + params["b1"]
    h = jnp.tanh(h.astype(jnp.bfloat16))
    h = jnp.dot(h, params["w2"].astype(jnp.bfloat16),
                preferred_element_type=jnp.float32) + params["b2"]
    h = jnp.tanh(h.astype(jnp.bfloat16))
    h = jnp.dot(h, params["w3"].astype(jnp.bfloat16),
                preferred_element_type=jnp.float32) + params["b3"]
    h = jnp.tanh(h.astype(jnp.bfloat16))
    w4_row = params["w4"].reshape(1, -1)
    return jnp.sum(h.astype(jnp.float32) * w4_row,
                   axis=-1, keepdims=True) + params["b4"]


if __name__ == "__main__":
    key = jax.random.PRNGKey(0)
    k_param, k_x = jax.random.split(key)

    batch = 200          # not a multiple of 128 -> exercises the ragged last block
    input_size = 32

    raw_params = init_params(k_param, input_size)
    params = prepare_params(raw_params)            # one-time, kernel-ready layouts
    x = jax.random.normal(k_x, (batch, input_size), dtype=jnp.float32)

    # B=200 -> tile=128 -> grid=(2,): both v7x TensorCores get work.
    out = nn_forward(x, params)
    out = jax.block_until_ready(out)

    assert out.shape == (batch, 1), out.shape

    ref_matched = reference_forward_matched(x, raw_params)
    err_matched = float(jnp.max(jnp.abs(out - ref_matched)))
    assert err_matched < 5e-2, f"mismatch vs bf16-matched reference: {err_matched}"

    ref_f32 = reference_forward_f32(x, raw_params)
    err_f32 = float(jnp.max(jnp.abs(out - ref_f32)))
    assert err_f32 < 1.5e-1, f"mismatch vs f32 semantic reference: {err_f32}"

    print("KERNEL_OK")
</pallas_src>

<mosaic_0001>
module attributes {stable_mosaic.version = 11 : i64} {
  func.func @_mlp_kernel(%arg0: i32, %arg1: memref<128x32xf32, #tpu.memory_space<vmem>>, %arg2: memref<32x512xbf16, #tpu.memory_space<vmem>>, %arg3: memref<1x512xf32, #tpu.memory_space<vmem>>, %arg4: memref<512x256xbf16, #tpu.memory_space<vmem>>, %arg5: memref<1x256xf32, #tpu.memory_space<vmem>>, %arg6: memref<256x128xbf16, #tpu.memory_space<vmem>>, %arg7: memref<1x128xf32, #tpu.memory_space<vmem>>, %arg8: memref<1x128xf32, #tpu.memory_space<vmem>>, %arg9: memref<1x1xf32, #tpu.memory_space<vmem>>, %arg10: memref<128x1xf32, #tpu.memory_space<vmem>>) attributes {dimension_semantics = [#tpu.dimension_semantics<parallel>], iteration_bounds = array<i64: 2>, scalar_prefetch = 0 : i64, scratch_operands = 0 : i64, tpu.core_type = #tpu.core_type<tc>, window_params = [{transform_indices = @transform_0, window_bounds = array<i64: 128, 32>}, {pipeline_mode = #tpu.pipeline_mode<synchronous>, transform_indices = @transform_1, window_bounds = array<i64: 32, 512>}, {pipeline_mode = #tpu.pipeline_mode<synchronous>, transform_indices = @transform_2, window_bounds = array<i64: 1, 512>}, {pipeline_mode = #tpu.pipeline_mode<synchronous>, transform_indices = @transform_3, window_bounds = array<i64: 512, 256>}, {pipeline_mode = #tpu.pipeline_mode<synchronous>, transform_indices = @transform_4, window_bounds = array<i64: 1, 256>}, {pipeline_mode = #tpu.pipeline_mode<synchronous>, transform_indices = @transform_5, window_bounds = array<i64: 256, 128>}, {pipeline_mode = #tpu.pipeline_mode<synchronous>, transform_indices = @transform_6, window_bounds = array<i64: 1, 128>}, {pipeline_mode = #tpu.pipeline_mode<synchronous>, transform_indices = @transform_7, window_bounds = array<i64: 1, 128>}, {pipeline_mode = #tpu.pipeline_mode<synchronous>, transform_indices = @transform_8, window_bounds = array<i64: 1, 1>}, {transform_indices = @transform_9, window_bounds = array<i64: 128, 1>}]} {
    %c0 = arith.constant 0 : index
    %c0_0 = arith.constant 0 : index
    %0 = vector.load %arg1[%c0, %c0_0] : memref<128x32xf32, #tpu.memory_space<vmem>>, vector<128x32xf32>
    %1 = arith.truncf %0 : vector<128x32xf32> to vector<128x32xbf16>
    %c0_1 = arith.constant 0 : index
    %c0_2 = arith.constant 0 : index
    %2 = vector.load %arg2[%c0_1, %c0_2] : memref<32x512xbf16, #tpu.memory_space<vmem>>, vector<32x512xbf16>
    %cst = arith.constant dense<0.000000e+00> : vector<128x512xf32>
    %3 = tpu.matmul %1, %2, %cst {dimension_numbers = #tpu.dot_dimension_numbers<[1], [0], [0], [1], [0, 0, 1, 1], [], []>} : vector<128x32xbf16>, vector<32x512xbf16>, vector<128x512xf32> -> vector<128x512xf32>
    %c0_3 = arith.constant 0 : index
    %c0_4 = arith.constant 0 : index
    %4 = vector.load %arg3[%c0_3, %c0_4] : memref<1x512xf32, #tpu.memory_space<vmem>>, vector<1x512xf32>
    %5 = vector.broadcast %4 : vector<1x512xf32> to vector<128x512xf32>
    %6 = arith.addf %3, %5 : vector<128x512xf32>
    %7 = arith.truncf %6 : vector<128x512xf32> to vector<128x512xbf16>
    %8 = math.tanh %7 : vector<128x512xbf16>
    %c0_5 = arith.constant 0 : index
    %c0_6 = arith.constant 0 : index
    %9 = vector.load %arg4[%c0_5, %c0_6] : memref<512x256xbf16, #tpu.memory_space<vmem>>, vector<512x256xbf16>
    %cst_7 = arith.constant dense<0.000000e+00> : vector<128x256xf32>
    %10 = tpu.matmul %8, %9, %cst_7 {dimension_numbers = #tpu.dot_dimension_numbers<[1], [0], [0], [1], [0, 0, 1, 1], [], []>} : vector<128x512xbf16>, vector<512x256xbf16>, vector<128x256xf32> -> vector<128x256xf32>
    %c0_8 = arith.constant 0 : index
    %c0_9 = arith.constant 0 : index
    %11 = vector.load %arg5[%c0_8, %c0_9] : memref<1x256xf32, #tpu.memory_space<vmem>>, vector<1x256xf32>
    %12 = vector.broadcast %11 : vector<1x256xf32> to vector<128x256xf32>
    %13 = arith.addf %10, %12 : vector<128x256xf32>
    %14 = arith.truncf %13 : vector<128x256xf32> to vector<128x256xbf16>
    %15 = math.tanh %14 : vector<128x256xbf16>
    %c0_10 = arith.constant 0 : index
    %c0_11 = arith.constant 0 : index
    %16 = vector.load %arg6[%c0_10, %c0_11] : memref<256x128xbf16, #tpu.memory_space<vmem>>, vector<256x128xbf16>
    %cst_12 = arith.constant dense<0.000000e+00> : vector<128x128xf32>
    %17 = tpu.matmul %15, %16, %cst_12 {dimension_numbers = #tpu.dot_dimension_numbers<[1], [0], [0], [1], [0, 0, 1, 1], [], []>} : vector<128x256xbf16>, vector<256x128xbf16>, vector<128x128xf32> -> vector<128x128xf32>
    %c0_13 = arith.constant 0 : index
    %c0_14 = arith.constant 0 : index
    %18 = vector.load %arg7[%c0_13, %c0_14] : memref<1x128xf32, #tpu.memory_space<vmem>>, vector<1x128xf32>
    %19 = vector.broadcast %18 : vector<1x128xf32> to vector<128x128xf32>
    %20 = arith.addf %17, %19 : vector<128x128xf32>
    %21 = arith.truncf %20 : vector<128x128xf32> to vector<128x128xbf16>
    %22 = math.tanh %21 : vector<128x128xbf16>
    %23 = arith.extf %22 : vector<128x128xbf16> to vector<128x128xf32>
    %c0_15 = arith.constant 0 : index
    %c0_16 = arith.constant 0 : index
    %24 = vector.load %arg8[%c0_15, %c0_16] : memref<1x128xf32, #tpu.memory_space<vmem>>, vector<1x128xf32>
    %25 = vector.broadcast %24 : vector<1x128xf32> to vector<128x128xf32>
    %26 = arith.mulf %23, %25 : vector<128x128xf32>
    %cst_17 = arith.constant dense<0.000000e+00> : vector<128xf32>
    %27 = vector.multi_reduction <add>, %26, %cst_17 [1] : vector<128x128xf32> to vector<128xf32>
    %28 = vector.shape_cast %27 : vector<128xf32> to vector<128x1xf32>
    %c0_18 = arith.constant 0 : index
    %c0_19 = arith.constant 0 : index
    %29 = vector.load %arg9[%c0_18, %c0_19] : memref<1x1xf32, #tpu.memory_space<vmem>>, vector<1x1xf32>
    %30 = vector.broadcast %29 : vector<1x1xf32> to vector<128x1xf32>
    %31 = arith.addf %28, %30 : vector<128x1xf32>
    %c0_20 = arith.constant 0 : index
    %c0_21 = arith.constant 0 : index
    %32 = vector.load %arg10[%c0_20, %c0_21] : memref<128x1xf32, #tpu.memory_space<vmem>>, vector<128x1xf32>
    tpu.vector_store %arg10[%c0_20, %c0_21], %31 {strides = array<i32>} : memref<128x1xf32, #tpu.memory_space<vmem>>, vector<128x1xf32>,
    return
  }
  func.func @transform_0(%arg0: i32) -> (i32, i32) {
    %c0_i32 = arith.constant 0 : i32
    %c0_i32_0 = arith.constant 0 : i32
    return %arg0, %c0_i32 : i32, i32
  }
  func.func @transform_1(%arg0: i32) -> (i32, i32) {
    %c0_i32 = arith.constant 0 : i32
    %c0_i32_0 = arith.constant 0 : i32
    %c0_i32_1 = arith.constant 0 : i32
    return %c0_i32, %c0_i32_0 : i32, i32
  }
  func.func @transform_2(%arg0: i32) -> (i32, i32) {
    %c0_i32 = arith.constant 0 : i32
    %c0_i32_0 = arith.constant 0 : i32
    %c0_i32_1 = arith.constant 0 : i32
    return %c0_i32, %c0_i32_0 : i32, i32
  }
  func.func @transform_3(%arg0: i32) -> (i32, i32) {
    %c0_i32 = arith.constant 0 : i32
    %c0_i32_0 = arith.constant 0 : i32
    %c0_i32_1 = arith.constant 0 : i32
    return %c0_i32, %c0_i32_0 : i32, i32
  }
  func.func @transform_4(%arg0: i32) -> (i32, i32) {
    %c0_i32 = arith.constant 0 : i32
    %c0_i32_0 = arith.constant 0 : i32
    %c0_i32_1 = arith.constant 0 : i32
    return %c0_i32, %c0_i32_0 : i32, i32
  }
  func.func @transform_5(%arg0: i32) -> (i32, i32) {
    %c0_i32 = arith.constant 0 : i32
    %c0_i32_0 = arith.constant 0 : i32
    %c0_i32_1 = arith.constant 0 : i32
    return %c0_i32, %c0_i32_0 : i32, i32
  }
  func.func @transform_6(%arg0: i32) -> (i32, i32) {
    %c0_i32 = arith.constant 0 : i32
    %c0_i32_0 = arith.constant 0 : i32
    %c0_i32_1 = arith.constant 0 : i32
    return %c0_i32, %c0_i32_0 : i32, i32
  }
  func.func @transform_7(%arg0: i32) -> (i32, i32) {
    %c0_i32 = arith.constant 0 : i32
    %c0_i32_0 = arith.constant 0 : i32
    %c0_i32_1 = arith.constant 0 : i32
    return %c0_i32, %c0_i32_0 : i32, i32
  }
  func.func @transform_8(%arg0: i32) -> (i32, i32) {
    %c0_i32 = arith.constant 0 : i32
    %c0_i32_0 = arith.constant 0 : i32
    %c0_i32_1 = arith.constant 0 : i32
    return %c0_i32, %c0_i32_0 : i32, i32
  }
  func.func @transform_9(%arg0: i32) -> (i32, i32) {
    %c0_i32 = arith.constant 0 : i32
    %c0_i32_0 = arith.constant 0 : i32
    return %arg0, %c0_i32 : i32, i32
  }
}

</mosaic_0001>

<llo_original>
// kernel: nn_forward.1
$region0: #{nn_forward.1}
  #allocation0 [shape = 'u32[]', space=smem, size = 0x4, offset = 0x4, fixed_abs, tag = 'smem constant byte address 0x4 - core index']
  #allocation1 [shape = 'u32[144,128]{1,0:T(1,128)}', space=vmem, size = 0x12000, scoped, tag = 'internal scratch']
  #allocation2 [shape = 'f32[1,1]{1,0:T(1,128)S(1)}', space=vmem, size = 0x200, scoped, tag = 'scoped memory for nn_forward.1']
  %s0 = inlined_call_operand.vmem [shape: f32[200,32], index: 0, kind: input, shape index: {}]
  %s1 = inlined_call_operand.vmem [shape: bf16[32,512], index: 1, kind: input, shape index: {}]
  %s2 = inlined_call_operand.vmem [shape: f32[1,512], index: 2, kind: input, shape index: {}]
  %s3 = inlined_call_operand.hbm [shape: bf16[512,256], index: 3, kind: input, shape index: {}]
  %s4 = inlined_call_operand.vmem [shape: f32[1,256], index: 4, kind: input, shape index: {}]
  %s5 = inlined_call_operand.vmem [shape: bf16[256,128], index: 5, kind: input, shape index: {}]
  %s6 = inlined_call_operand.vmem [shape: f32[1,128], index: 6, kind: input, shape index: {}]
  %s7 = inlined_call_operand.vmem [shape: f32[1,128], index: 7, kind: input, shape index: {}]
  %s8 = inlined_call_operand.<no memory space> [shape: f32[1,1], index: 8, kind: input, shape index: {}]
  %s9 = inlined_call_operand.vmem [shape: f32[200,1], index: 9, kind: output, shape index: {}]
  %s10 = sld [smem:[#allocation0]]
  $region121: #{nn_forward.1} parent=0
    _
  %s12 = ssub.s32 1, %s10
  %s13 = scalar_select 0, %s12, %s10
  %v14 = vstv %s8
  %15 = vst [vmem:[#allocation2] sm:$0x1] %v14
  $region1: #{nn_forward.1} parent=0
    #allocation3 [shape = 'u8[262144]{0}', space=vmem, size = 0x40000, scoped, tag = 'input window, operand 3, single buffered']
    #allocation4 [shape = 's32[2]{0}', space=sflag, size = 0x8, scoped, tag = 'scoped memory for nn_forward.1']
    #allocation5 [shape = 'u8[131072]{0}', space=vmem, size = 0x20000, scoped, tag = 'output window, operand 0']
    %16 = vsyncpa [#allocation4], 0
    loop: start=0, step=1, limit=4
    $region2: #{nn_forward.1} parent=1 // loop_pre_header
      _
    $region3: #{nn_forward.1} parent=1 // loop_header
      %s18 = sphi 0, %s22
      %p19 = scmp.ge.s32.totalorder %s18, 4
      %s28 = sphi 0, %s30
      %s31 = sphi 0, %s28
      %s32 = sphi 0, %s31
      %s48 = sphi 0, %s32
      %s52 = sphi 0, %s52
      %s54 = sphi 0, %s52
      %s55 = sphi 0, %s54
      %s69 = sphi 0, %s55
      %s73 = sphi 0, %s73
      %s75 = sphi 0, %s73
      %s76 = sphi 0, %s75
      %s90 = sphi 0, %s76
      %s94 = sphi 0, %s94
      %s96 = sphi 0, %s94
      %s97 = sphi 0, %s96
      %s111 = sphi 0, %s97
      %s115 = sphi 0, %s115
      %s117 = sphi 0, %s115
      %s118 = sphi 0, %s117
      %s132 = sphi 0, %s118
      %s136 = sphi 0, %s136
      %s138 = sphi 0, %s136
      %s139 = sphi 0, %s138
      %s153 = sphi 0, %s139
      %s157 = sphi 0, %s157
      %s159 = sphi 0, %s157
      %s160 = sphi 0, %s159
      %s174 = sphi 0, %s160
      %s178 = sphi 0, %s178
      %s180 = sphi 0, %s178
      %s181 = sphi 0, %s180
      %s195 = sphi 0, %s181
      %s199 = sphi 0, %s199
      %s201 = sphi 0, %s199
      %s202 = sphi 0, %s201
      %s216 = sphi 0, %s202
      %s222 = sphi 0, %s224
      %s225 = sphi 0, %s222
      %s226 = sphi 0, %s225
      %s242 = sphi 0, %s226
    $region4: #{nn_forward.1} parent=1 // loop_header_branch
      %21 = sbr.rel (%p19) target = $region8
    $region5: #{nn_forward.1} parent=1 // loop_body
      %s23 = ssub.s32 %s18, 1
      %s24 = ssub.s32 %s18, 2
      %s25 = sadd.s32 %s18, 1
      %s26 = ssub.s32 %s18, %s25
      %p27 = scmp.eq.s32.totalorder %s26, 0
      %s29 = sadd.s32 %s28, 1
      %s30 = scalar_select %p27, %s28, %s29
      %p33 = pneg %p27
      %p34 = scmp.eq.s32.totalorder %s18, 1
      %p35 = por %p33, %p34
      %p36 = scmp.ne.s32.totalorder %s28, %s31
      %p37 = scmp.eq.s32.totalorder %s18, 0
      %p38 = por %p36, %p37
      %p39 = scmp.ne.s32.totalorder %s28, %s31
      %p40 = scmp.eq.s32.totalorder %s23, 1
      %p41 = por %p39, %p40
      %p42 = scmp.ne.s32.totalorder %s31, %s32
      %p43 = scmp.eq.s32.totalorder %s23, 0
      %p44 = por %p42, %p43
      %p45 = scmp.ne.s32.totalorder %s31, %s32
      %p46 = scmp.eq.s32.totalorder %s24, 1
      %p47 = por %p45, %p46
      %p49 = scmp.ne.s32.totalorder %s32, %s48
      %p50 = scmp.eq.s32.totalorder %s24, 0
      %p51 = por %p49, %p50
      %s53 = sadd.s32 %s52, 1
      %p56 = scmp.eq.s32.totalorder %s18, 1
      %p57 = scmp.ne.s32.totalorder %s52, %s54
      %p58 = scmp.eq.s32.totalorder %s18, 0
      %p59 = por %p57, %p58
      %p60 = scmp.ne.s32.totalorder %s52, %s54
      %p61 = scmp.eq.s32.totalorder %s23, 1
      %p62 = por %p60, %p61
      %p63 = scmp.ne.s32.totalorder %s54, %s55
      %p64 = scmp.eq.s32.totalorder %s23, 0
      %p65 = por %p63, %p64
      %p66 = scmp.ne.s32.totalorder %s54, %s55
      %p67 = scmp.eq.s32.totalorder %s24, 1
      %p68 = por %p66, %p67
      %p70 = scmp.ne.s32.totalorder %s55, %s69
      %p71 = scmp.eq.s32.totalorder %s24, 0
      %p72 = por %p70, %p71
      %s74 = sadd.s32 %s73, 1
      %p77 = scmp.eq.s32.totalorder %s18, 1
      %p78 = scmp.ne.s32.totalorder %s73, %s75
      %p79 = scmp.eq.s32.totalorder %s18, 0
      %p80 = por %p78, %p79
      %p81 = scmp.ne.s32.totalorder %s73, %s75
      %p82 = scmp.eq.s32.totalorder %s23, 1
      %p83 = por %p81, %p82
      %p84 = scmp.ne.s32.totalorder %s75, %s76
      %p85 = scmp.eq.s32.totalorder %s23, 0
      %p86 = por %p84, %p85
      %p87 = scmp.ne.s32.totalorder %s75, %s76
      %p88 = scmp.eq.s32.totalorder %s24, 1
      %p89 = por %p87, %p88
      %p91 = scmp.ne.s32.totalorder %s76, %s90
      %p92 = scmp.eq.s32.totalorder %s24, 0
      %p93 = por %p91, %p92
      %s95 = sadd.s32 %s94, 1
      %p98 = scmp.eq.s32.totalorder %s18, 1
      %p99 = scmp.ne.s32.totalorder %s94, %s96
      %p100 = scmp.eq.s32.totalorder %s18, 0
      %p101 = por %p99, %p100
      %p102 = scmp.ne.s32.totalorder %s94, %s96
      %p103 = scmp.eq.s32.totalorder %s23, 1
      %p104 = por %p102, %p103
      %p105 = scmp.ne.s32.totalorder %s96, %s97
      %p106 = scmp.eq.s32.totalorder %s23, 0
      %p107 = por %p105, %p106
      %p108 = scmp.ne.s32.totalorder %s96, %s97
      %p109 = scmp.eq.s32.totalorder %s24, 1
      %p110 = por %p108, %p109
      %p112 = scmp.ne.s32.totalorder %s97, %s111
      %p113 = scmp.eq.s32.totalorder %s24, 0
      %p114 = por %p112, %p113
      %s116 = sadd.s32 %s115, 1
      %p119 = scmp.eq.s32.totalorder %s18, 1
      %p120 = scmp.ne.s32.totalorder %s115, %s117
      %p121 = scmp.eq.s32.totalorder %s18, 0
      %p122 = por %p120, %p121
      %p123 = scmp.ne.s32.totalorder %s115, %s117
      %p124 = scmp.eq.s32.totalorder %s23, 1
      %p125 = por %p123, %p124
      %p126 = scmp.ne.s32.totalorder %s117, %s118
      %p127 = scmp.eq.s32.totalorder %s23, 0
      %p128 = por %p126, %p127
      %p129 = scmp.ne.s32.totalorder %s117, %s118
      %p130 = scmp.eq.s32.totalorder %s24, 1
      %p131 = por %p129, %p130
      %p133 = scmp.ne.s32.totalorder %s118, %s132
      %p134 = scmp.eq.s32.totalorder %s24, 0
      %p135 = por %p133, %p134
      %s137 = sadd.s32 %s136, 1
      %p140 = scmp.eq.s32.totalorder %s18, 1
      %p141 = scmp.ne.s32.totalorder %s136, %s138
      %p142 = scmp.eq.s32.totalorder %s18, 0
      %p143 = por %p141, %p142
      %p144 = scmp.ne.s32.totalorder %s136, %s138
      %p145 = scmp.eq.s32.totalorder %s23, 1
      %p146 = por %p144, %p145
      %p147 = scmp.ne.s32.totalorder %s138, %s139
      %p148 = scmp.eq.s32.totalorder %s23, 0
      %p149 = por %p147, %p148
      %p150 = scmp.ne.s32.totalorder %s138, %s139
      %p151 = scmp.eq.s32.totalorder %s24, 1
      %p152 = por %p150, %p151
      %p154 = scmp.ne.s32.totalorder %s139, %s153
      %p155 = scmp.eq.s32.totalorder %s24, 0
      %p156 = por %p154, %p155
      %s158 = sadd.s32 %s157, 1
      %p161 = scmp.eq.s32.totalorder %s18, 1
      %p162 = scmp.ne.s32.totalorder %s157, %s159
      %p163 = scmp.eq.s32.totalorder %s18, 0
      %p164 = por %p162, %p163
      %p165 = scmp.ne.s32.totalorder %s157, %s159
      %p166 = scmp.eq.s32.totalorder %s23, 1
      %p167 = por %p165, %p166
      %p168 = scmp.ne.s32.totalorder %s159, %s160
      %p169 = scmp.eq.s32.totalorder %s23, 0
      %p170 = por %p168, %p169
      %p171 = scmp.ne.s32.totalorder %s159, %s160
      %p172 = scmp.eq.s32.totalorder %s24, 1
      %p173 = por %p171, %p172
      %p175 = scmp.ne.s32.totalorder %s160, %s174
      %p176 = scmp.eq.s32.totalorder %s24, 0
      %p177 = por %p175, %p176
      %s179 = sadd.s32 %s178, 1
      %p182 = scmp.eq.s32.totalorder %s18, 1
      %p183 = scmp.ne.s32.totalorder %s178, %s180
      %p184 = scmp.eq.s32.totalorder %s18, 0
      %p185 = por %p183, %p184
      %p186 = scmp.ne.s32.totalorder %s178, %s180
      %p187 = scmp.eq.s32.totalorder %s23, 1
      %p188 = por %p186, %p187
      %p189 = scmp.ne.s32.totalorder %s180, %s181
      %p190 = scmp.eq.s32.totalorder %s23, 0
      %p191 = por %p189, %p190
      %p192 = scmp.ne.s32.totalorder %s180, %s181
      %p193 = scmp.eq.s32.totalorder %s24, 1
      %p194 = por %p192, %p193
      %p196 = scmp.ne.s32.totalorder %s181, %s195
      %p197 = scmp.eq.s32.totalorder %s24, 0
      %p198 = por %p196, %p197
      %s200 = sadd.s32 %s199, 1
      %p203 = scmp.eq.s32.totalorder %s18, 1
      %p204 = scmp.ne.s32.totalorder %s199, %s201
      %p205 = scmp.eq.s32.totalorder %s18, 0
      %p206 = por %p204, %p205
      %p207 = scmp.ne.s32.totalorder %s199, %s201
      %p208 = scmp.eq.s32.totalorder %s23, 1
      %p209 = por %p207, %p208
      %p210 = scmp.ne.s32.totalorder %s201, %s202
      %p211 = scmp.eq.s32.totalorder %s23, 0
      %p212 = por %p210, %p211
      %p213 = scmp.ne.s32.totalorder %s201, %s202
      %p214 = scmp.eq.s32.totalorder %s24, 1
      %p215 = por %p213, %p214
      %p217 = scmp.ne.s32.totalorder %s202, %s216
      %p218 = scmp.eq.s32.totalorder %s24, 0
      %p219 = por %p217, %p218
      %s220 = ssub.s32 %s18, %s25
      %p221 = scmp.eq.s32.totalorder %s220, 0
      %s223 = sadd.s32 %s222, 1
      %s224 = scalar_select %p221, %s222, %s223
      %p227 = pneg %p221
      %p228 = scmp.eq.s32.totalorder %s18, 1
      %p229 = por %p227, %p228
      %p230 = scmp.ne.s32.totalorder %s222, %s225
      %p231 = scmp.eq.s32.totalorder %s18, 0
      %p232 = por %p230, %p231
      %p233 = scmp.ne.s32.totalorder %s222, %s225
      %p234 = scmp.eq.s32.totalorder %s23, 1
      %p235 = por %p233, %p234
      %p236 = scmp.ne.s32.totalorder %s225, %s226
      %p237 = scmp.eq.s32.totalorder %s23, 0
      %p238 = por %p236, %p237
      %p239 = scmp.ne.s32.totalorder %s225, %s226
      %p240 = scmp.eq.s32.totalorder %s24, 1
      %p241 = por %p239, %p240
      %p243 = scmp.ne.s32.totalorder %s226, %s242
      %p244 = scmp.eq.s32.totalorder %s24, 0
      %p245 = por %p243, %p244
      %p246 = scmp.le.s32.totalorder 1, %s18
      %p247 = scmp.lt.s32.totalorder %s18, 3
      %p248 = pnand %p246, %p247
      %p249 = pneg %p248
      // Predicated region
      $region9: #{nn_forward.1} parent=5 // pred_check
        _
      $region10: #{nn_forward.1} parent=5 // pred_check_branch
        %251 = sbr.rel (%p248) target = $region12
      $region11: #{nn_forward.1} parent=5 // pred_region
        %s252 = ssub.s32 %s18, 1
        // Predicated region
        $region13: #{nn_forward.1} parent=11 // pred_check
          %p253 = pneg %p65
        $region14: #{nn_forward.1} parent=11 // pred_check_branch
          %255 = sbr.rel (%p253) target = $region16
        $region15: #{nn_forward.1} parent=11 // pred_region
          _
        $region16: #{nn_forward.1} parent=11 // pred_fallthru
          _
        // Predicated region
        $region17: #{nn_forward.1} parent=11 // pred_check
          %p256 = pneg %p86
        $region18: #{nn_forward.1} parent=11 // pred_check_branch
          %258 = sbr.rel (%p256) target = $region20
        $region19: #{nn_forward.1} parent=11 // pred_region
          _
        $region20: #{nn_forward.1} parent=11 // pred_fallthru
          _
        // Predicated region
        $region21: #{nn_forward.1} parent=11 // pred_check
          %p259 = pneg %p107
        $region22: #{nn_forward.1} parent=11 // pred_check_branch
          %261 = sbr.rel (%p259) target = $region24
        $region23: #{nn_forward.1} parent=11 // pred_region
          %s263 = ssub.s32 8192, 8192
          %264 = vsyncadd [#allocation4], %s263
          %s265 = sshll.u32 [#allocation3], 4
          %s266 = int_to_ptr.vmem [resolvable:$true] %s265
          %271 = dma.hbm_to_vmem [thread:$0]  %s3, 8192, %s266, [#allocation4], 128, 128, 8
        $region24: #{nn_forward.1} parent=11 // pred_fallthru
          _
        // Predicated region
        $region25: #{nn_forward.1} parent=11 // pred_check
          %p272 = pneg %p128
        $region26: #{nn_forward.1} parent=11 // pred_check_branch
          %274 = sbr.rel (%p272) target = $region28
        $region27: #{nn_forward.1} parent=11 // pred_region
          _
        $region28: #{nn_forward.1} parent=11 // pred_fallthru
          _
        // Predicated region
        $region29: #{nn_forward.1} parent=11 // pred_check
          %p275 = pneg %p149
        $region30: #{nn_forward.1} parent=11 // pred_check_branch
          %277 = sbr.rel (%p275) target = $region32
        $region31: #{nn_forward.1} parent=11 // pred_region
          _
        $region32: #{nn_forward.1} parent=11 // pred_fallthru
          _
        // Predicated region
        $region33: #{nn_forward.1} parent=11 // pred_check
          %p278 = pneg %p170
        $region34: #{nn_forward.1} parent=11 // pred_check_branch
          %280 = sbr.rel (%p278) target = $region36
        $region35: #{nn_forward.1} parent=11 // pred_region
          _
        $region36: #{nn_forward.1} parent=11 // pred_fallthru
          _
        // Predicated region
        $region37: #{nn_forward.1} parent=11 // pred_check
          %p281 = pneg %p191
        $region38: #{nn_forward.1} parent=11 // pred_check_branch
          %283 = sbr.rel (%p281) target = $region40
        $region39: #{nn_forward.1} parent=11 // pred_region
          _
        $region40: #{nn_forward.1} parent=11 // pred_fallthru
          _
        // Predicated region
        $region41: #{nn_forward.1} parent=11 // pred_check
          %p284 = pneg %p212
        $region42: #{nn_forward.1} parent=11 // pred_check_branch
          %286 = sbr.rel (%p284) target = $region44
        $region43: #{nn_forward.1} parent=11 // pred_region
          _
        $region44: #{nn_forward.1} parent=11 // pred_fallthru
          _
      $region12: #{nn_forward.1} parent=5 // pred_fallthru
        _
      %p287 = scmp.lt.s32.totalorder %s18, 2
      // Predicated region
      $region45: #{nn_forward.1} parent=5 // pred_check
        %p288 = pneg %p287
      $region46: #{nn_forward.1} parent=5 // pred_check_branch
        %290 = sbr.rel (%p288) target = $region48
      $region47: #{nn_forward.1} parent=5 // pred_region
        // Predicated region
        $region49: #{nn_forward.1} parent=47 // pred_check
          %p291 = pneg %p38
        $region50: #{nn_forward.1} parent=47 // pred_check_branch
          %293 = sbr.rel (%p291) target = $region52
        $region51: #{nn_forward.1} parent=47 // pred_region
          %s294 = smul.u32 16, %s18
          %s295 = ssub.s32 25, %s294
          %p296 = scmp.lt.s32.totalorder %s295, 16
          %s297 = scalar_select %p296, %s295, 16
          %s298 = smul.u32 128, %s297
          %p299 = scmp.lt.s32.totalorder %s294, 24
          %s300 = scalar_select %p299, %s294, 24
          %s301 = smul.addr %s300, 8
          %s302 = scalar_lea.vmem %s0, %s301
          %s303 = smul.u32 16, %s18
          %s304 = ssub.s32 25, %s303
          %p305 = scmp.lt.s32.totalorder %s304, 16
          %s306 = scalar_select %p305, %s304, 16
          %s307 = smul.u32 128, %s306
        $region52: #{nn_forward.1} parent=47 // pred_fallthru
          _
      $region48: #{nn_forward.1} parent=5 // pred_fallthru
        _
      %p308 = scmp.le.s32.totalorder 1, %s18
      %p309 = scmp.lt.s32.totalorder %s18, 3
      %p310 = pnand %p308, %p309
      %p311 = pneg %p310
      // Predicated region
      $region53: #{nn_forward.1} parent=5 // pred_check
        _
      $region54: #{nn_forward.1} parent=5 // pred_check_branch
        %313 = sbr.rel (%p310) target = $region56
      $region55: #{nn_forward.1} parent=5 // pred_region
        %s314 = ssub.s32 %s18, 1
        // Predicated region
        $region57: #{nn_forward.1} parent=55 // pred_check
          %p315 = pneg %p107
        $region58: #{nn_forward.1} parent=55 // pred_check_branch
          %317 = sbr.rel (%p315) target = $region60
        $region59: #{nn_forward.1} parent=55 // pred_region
          %318 = dma.done [#allocation4], 8192
        $region60: #{nn_forward.1} parent=55 // pred_fallthru
          _
        %s319 = smul.u32 16, %s23
        %s320 = ssub.s32 25, %s319
        %p321 = scmp.lt.s32.totalorder %s320, 16
        %s322 = scalar_select %p321, %s320, 16
        %s323 = smul.u32 128, %s322
        %p324 = scmp.lt.s32.totalorder %s319, 24
        %s325 = scalar_select %p324, %s319, 24
        %s326 = smul.addr %s325, 8
        %s327 = scalar_lea.vmem %s0, %s326
        %p328 = pneg %p44
        %p329 = pneg %p41
        %p330 = pneg %p65
        %p331 = pneg %p62
        %p332 = pneg %p86
        %p333 = pneg %p83
        %p334 = pneg %p107
        %p335 = pneg %p104
        %p336 = pneg %p128
        %p337 = pneg %p125
        %p338 = pneg %p149
        %p339 = pneg %p146
        %p340 = pneg %p170
        %p341 = pneg %p167
        %p342 = pneg %p191
        %p343 = pneg %p188
        %p344 = pneg %p212
        %p345 = pneg %p209
        %p346 = pneg %p238
        %p347 = pneg %p235
        %s348 = sand.u32 %s225, 1
        %s349 = sand.u32 %s225, 1
        %s350 = smul.addr %s349, 128
        %s351 = scalar_lea.vmem [#allocation5], %s350
        %s352 = smul.u32 16, %s23
        %s353 = ssub.s32 25, %s352
        %p354 = scmp.lt.s32.totalorder %s353, 16
        %s355 = scalar_select %p354, %s353, 16
        %s356 = smul.u32 128, %s355
        %p357 = scmp.lt.s32.totalorder %s352, 24
        %s358 = scalar_select %p357, %s352, 24
        %s359 = smul.addr %s358, 8
        %s360 = scalar_lea.vmem %s0, %s359
        %s361 = smul.u32 16, %s23
        %s362 = ssub.s32 25, %s361
        %p363 = scmp.lt.s32.totalorder %s362, 16
        %s364 = scalar_select %p363, %s362, 16
        %s365 = smul.u32 128, %s364
        %s366 = smul.u32 16, %s23
        %s367 = ssub.s32 25, %s366
        %p368 = scmp.lt.s32.totalorder %s367, 16
        %s369 = scalar_select %p368, %s367, 16
        %s370 = smul.u32 128, %s369
        %v372 = vld [vmem:[%s360] sm:$0xff]
        %v373 = vld [vmem:[%s360 + $0x8] sm:$0xff]
        %v374 = vld [vmem:[%s360 + $0x10] sm:$0xff]
        %v375 = vld [vmem:[%s360 + $0x18] sm:$0xff]
        %v376 = vld [vmem:[%s360 + $0x20] sm:$0xff]
        %v377 = vld [vmem:[%s360 + $0x28] sm:$0xff]
        %v378 = vld [vmem:[%s360 + $0x30] sm:$0xff]
        %v379 = vld [vmem:[%s360 + $0x38] sm:$0xff]
        %v380 = vld [vmem:[%s360 + $0x40] sm:$0xff]
        %v381 = vld [vmem:[%s360 + $0x48] sm:$0xff]
        %v382 = vld [vmem:[%s360 + $0x50] sm:$0xff]
        %v383 = vld [vmem:[%s360 + $0x58] sm:$0xff]
        %v384 = vld [vmem:[%s360 + $0x60] sm:$0xff]
        %v385 = vld [vmem:[%s360 + $0x68] sm:$0xff]
        %v386 = vld [vmem:[%s360 + $0x70] sm:$0xff]
        %v387 = vld [vmem:[%s360 + $0x78] sm:$0xff]
        %v388 = vpack.c.bf16 %v373, %v372
        %v389 = vpack.c.bf16 %v375, %v374
        %v390 = vpack.c.bf16 %v377, %v376
        %v391 = vpack.c.bf16 %v379, %v378
        %v392 = vpack.c.bf16 %v381, %v380
        %v393 = vpack.c.bf16 %v383, %v382
        %v394 = vpack.c.bf16 %v385, %v384
        %v395 = vpack.c.bf16 %v387, %v386
        %v396 = vld [vmem:[%s1] sm:$0xff]
        %v397 = vld [vmem:[%s1 + $0x8] sm:$0xff]
        %v398 = vld [vmem:[%s1 + $0x10] sm:$0xff]
        %v399 = vld [vmem:[%s1 + $0x18] sm:$0xff]
        %v400 = vld [vmem:[%s1 + $0x20] sm:$0xff]
        %v401 = vld [vmem:[%s1 + $0x28] sm:$0xff]
        %v402 = vld [vmem:[%s1 + $0x30] sm:$0xff]
        %v403 = vld [vmem:[%s1 + $0x38] sm:$0xff]
        %v404 = vld [vmem:[%s2] sm:$0xf]
        %v406 = vlaneseq
        %v407 = vshrl.u32 %v406, 7
        %v408 = vsub.s32 0, %v407
        %v409 = vrot.slane %v404, %v408
        %v410 = vlaneseq
        %v411 = vshrl.u32 %v410, 7
        %v412 = vsub.s32 1, %v411
        %v413 = vrot.slane %v404, %v412
        %v414 = vlaneseq
        %v415 = vshrl.u32 %v414, 7
        %v416 = vsub.s32 2, %v415
        %v417 = vrot.slane %v404, %v416
        %v418 = vlaneseq
        %v419 = vshrl.u32 %v418, 7
        %v420 = vsub.s32 3, %v419
        %v421 = vrot.slane %v404, %v420
        %v434 = vunpack.c.l.b16 %v396
        %v435 = vunpack.c.h.b16 %v396
        %v436 = vunpack.c.l.b16 %v397
        %v437 = vunpack.c.h.b16 %v397
        %v438 = vunpack.c.l.b16 %v398
        %v439 = vunpack.c.h.b16 %v398
        %v440 = vunpack.c.l.b16 %v399
        %v441 = vunpack.c.h.b16 %v399
        %v442 = vunpack.c.l.b16 %v400
        %v443 = vunpack.c.h.b16 %v400
        %v444 = vunpack.c.l.b16 %v401
        %v445 = vunpack.c.h.b16 %v401
        %v446 = vunpack.c.l.b16 %v402
        %v447 = vunpack.c.h.b16 %v402
        %v448 = vunpack.c.l.b16 %v403
        %v449 = vunpack.c.h.b16 %v403
        %v450 = vpack.c.b16 %v438, %v434
        %v451 = vpack.c.b16 %v439, %v435
        %v452 = vpack.c.b16 %v440, %v436
        %v453 = vpack.c.b16 %v441, %v437
        %v454 = vpack.c.b16 %v446, %v442
        %v455 = vpack.c.b16 %v447, %v443
        %v456 = vpack.c.b16 %v448, %v444
        %v457 = vpack.c.b16 %v449, %v445
        %vm466 = vcmask 261120
        %v468 = vsel %vm466, %v388, 0
        %v471 = vsel %vm466, %v389, 0
        %v474 = vsel %vm466, %v390, 0
        %v477 = vsel %vm466, %v391, 0
        %v480 = vsel %vm466, %v392, 0
        %v483 = vsel %vm466, %v393, 0
        %v486 = vsel %vm466, %v394, 0
        %v489 = vsel %vm466, %v395, 0
        %491 = vmatprep.subr.bf16.mxu0 0
        %492 = vmatpush1.bf16.msra.mxu0 0
        %493 = vmatprep.subr.bf16.mxu0 0
        %494 = vmatpush1.bf16.msra.mxu0 0
        %495 = vmatprep.subr.bf16.mxu0 0
        %496 = vmatpush1.bf16.msra.mxu0 0
        %497 = vmatprep.subr.bf16.mxu0 0
        %498 = vmatpush1.bf16.msra.mxu0 0
        %499 = vmatprep.subr.bf16.mxu0 0
        %500 = vmatpush1.bf16.msra.mxu0 0
        %501 = vmatprep.subr.bf16.mxu0 0
        %502 = vmatpush1.bf16.msra.mxu0 0
        %503 = vmatprep.subr.bf16.mxu0 %v455
        %504 = vmatpush1.bf16.msra.mxu0 %v454
        %505 = vmatprep.subr.bf16.mxu0 %v451
        %506 = vmatpush1.bf16.msra.mxu0 %v450
        %507 = vmatprep.subr.bf16.mxu0 0
        %508 = vmatpush2.bf16.msra.mxu0 0
        %509 = vmatprep.subr.bf16.mxu0 0
        %510 = vmatpush2.bf16.msra.mxu0 0
        %511 = vmatprep.subr.bf16.mxu0 0
        %512 = vmatpush2.bf16.msra.mxu0 0
        %513 = vmatprep.subr.bf16.mxu0 0
        %514 = vmatpush2.bf16.msra.mxu0 0
        %515 = vmatprep.subr.bf16.mxu0 0
        %516 = vmatpush2.bf16.msra.mxu0 0
        %517 = vmatprep.subr.bf16.mxu0 0
        %518 = vmatpush2.bf16.msra.mxu0 0
        %519 = vmatprep.subr.bf16.mxu0 0
        %520 = vmatpush2.bf16.msra.mxu0 0
        %521 = vmatprep.subr.bf16.mxu0 0
        %522 = vmatpush2.bf16.msra.mxu0 0
        %523 = vmatprep.mubr.bf16.mxu0 0
        %524 = vmatmul.mubr.bf16.gmra.mxu0 %v468
        %v525 = vpop.f32.mrf.mxu0
        %v526 = vadd.f32 %v409, %v525
        %v527 = vpop.f32.mrf.mxu0
        %v528 = vadd.f32 %v413, %v527
        %v529 = vpop.f32.mrf.mxu0
        %v530 = vadd.f32 %v409, %v529
        %v531 = vpop.f32.mrf.mxu0
        %v532 = vadd.f32 %v413, %v531
        %533 = vmatprep.mubr.bf16.mxu0 0
        %534 = vmatmul.mubr.bf16.gmra.mxu0 %v471
        %v535 = vpop.f32.mrf.mxu0
        %v536 = vadd.f32 %v409, %v535
        %v537 = vpop.f32.mrf.mxu0
        %v538 = vadd.f32 %v413, %v537
        %v539 = vpop.f32.mrf.mxu0
        %v540 = vadd.f32 %v409, %v539
        %v541 = vpop.f32.mrf.mxu0
        %v542 = vadd.f32 %v413, %v541
        %543 = vmatprep.mubr.bf16.mxu0 0
        %544 = vmatmul.mubr.bf16.gmra.mxu0 %v474
        %v545 = vpop.f32.mrf.mxu0
        %v546 = vadd.f32 %v409, %v545
        %v547 = vpop.f32.mrf.mxu0
        %v548 = vadd.f32 %v413, %v547
        %v549 = vpop.f32.mrf.mxu0
        %v550 = vadd.f32 %v409, %v549
        %v551 = vpop.f32.mrf.mxu0
        %v552 = vadd.f32 %v413, %v551
        %553 = vmatprep.mubr.bf16.mxu0 0
        %554 = vmatmul.mubr.bf16.gmra.mxu0 %v477
        %v555 = vpop.f32.mrf.mxu0
        %v556 = vadd.f32 %v409, %v555
        %v557 = vpop.f32.mrf.mxu0
        %v558 = vadd.f32 %v413, %v557
        %v559 = vpop.f32.mrf.mxu0
        %v560 = vadd.f32 %v409, %v559
        %v561 = vpop.f32.mrf.mxu0
        %v562 = vadd.f32 %v413, %v561
        %563 = vmatprep.mubr.bf16.mxu0 0
        %564 = vmatmul.mubr.bf16.gmra.mxu0 %v480
        %v565 = vpop.f32.mrf.mxu0
        %v566 = vadd.f32 %v409, %v565
        %v567 = vpop.f32.mrf.mxu0
        %v568 = vadd.f32 %v413, %v567
        %v569 = vpop.f32.mrf.mxu0
        %v570 = vadd.f32 %v409, %v569
        %v571 = vpop.f32.mrf.mxu0
        %v572 = vadd.f32 %v413, %v571
        %573 = vmatprep.mubr.bf16.mxu0 0
        %574 = vmatmul.mubr.bf16.gmra.mxu0 %v483
        %v575 = vpop.f32.mrf.mxu0
        %v576 = vadd.f32 %v409, %v575
        %v577 = vpop.f32.mrf.mxu0
        %v578 = vadd.f32 %v413, %v577
        %v579 = vpop.f32.mrf.mxu0
        %v580 = vadd.f32 %v409, %v579
        %v581 = vpop.f32.mrf.mxu0
        %v582 = vadd.f32 %v413, %v581
        %583 = vmatprep.mubr.bf16.mxu0 0
        %584 = vmatmul.mubr.bf16.gmra.mxu0 %v486
        %v585 = vpop.f32.mrf.mxu0
        %v586 = vadd.f32 %v409, %v585
        %v587 = vpop.f32.mrf.mxu0
        %v588 = vadd.f32 %v413, %v587
        %v589 = vpop.f32.mrf.mxu0
        %v590 = vadd.f32 %v409, %v589
        %v591 = vpop.f32.mrf.mxu0
        %v592 = vadd.f32 %v413, %v591
        %593 = vmatprep.mubr.bf16.mxu0 0
        %594 = vmatmul.mubr.bf16.gmra.mxu0 %v489
        %v595 = vpop.f32.mrf.mxu0
        %v596 = vadd.f32 %v409, %v595
        %v597 = vpop.f32.mrf.mxu0
        %v598 = vadd.f32 %v413, %v597
        %v599 = vpop.f32.mrf.mxu0
        %v600 = vadd.f32 %v409, %v599
        %v601 = vpop.f32.mrf.mxu0
        %v602 = vadd.f32 %v413, %v601
        %603 = vdwg.mxu0
        %604 = vmatprep.subr.bf16.mxu0 0
        %605 = vmatpush1.bf16.msra.mxu0 0
        %606 = vmatprep.subr.bf16.mxu0 0
        %607 = vmatpush1.bf16.msra.mxu0 0
        %608 = vmatprep.subr.bf16.mxu0 0
        %609 = vmatpush1.bf16.msra.mxu0 0
        %610 = vmatprep.subr.bf16.mxu0 0
        %611 = vmatpush1.bf16.msra.mxu0 0
        %612 = vmatprep.subr.bf16.mxu0 0
        %613 = vmatpush1.bf16.msra.mxu0 0
        %614 = vmatprep.subr.bf16.mxu0 0
        %615 = vmatpush1.bf16.msra.mxu0 0
        %616 = vmatprep.subr.bf16.mxu0 %v457
        %617 = vmatpush1.bf16.msra.mxu0 %v456
        %618 = vmatprep.subr.bf16.mxu0 %v453
        %619 = vmatpush1.bf16.msra.mxu0 %v452
        %620 = vmatprep.subr.bf16.mxu0 0
        %621 = vmatpush2.bf16.msra.mxu0 0
        %622 = vmatprep.subr.bf16.mxu0 0
        %623 = vmatpush2.bf16.msra.mxu0 0
        %624 = vmatprep.subr.bf16.mxu0 0
        %625 = vmatpush2.bf16.msra.mxu0 0
        %626 = vmatprep.subr.bf16.mxu0 0
        %627 = vmatpush2.bf16.msra.mxu0 0
        %628 = vmatprep.subr.bf16.mxu0 0
        %629 = vmatpush2.bf16.msra.mxu0 0
        %630 = vmatprep.subr.bf16.mxu0 0
        %631 = vmatpush2.bf16.msra.mxu0 0
        %632 = vmatprep.subr.bf16.mxu0 0
        %633 = vmatpush2.bf16.msra.mxu0 0
        %634 = vmatprep.subr.bf16.mxu0 0
        %635 = vmatpush2.bf16.msra.mxu0 0
        %636 = vmatprep.mubr.bf16.mxu0 0
        %637 = vmatmul.mubr.bf16.gmra.mxu0 %v468
        %v638 = vpop.f32.mrf.mxu0
        %v639 = vadd.f32 %v417, %v638
        %v640 = vpop.f32.mrf.mxu0
        %v641 = vadd.f32 %v421, %v640
        %v642 = vpop.f32.mrf.mxu0
        %v643 = vadd.f32 %v417, %v642
        %v644 = vpop.f32.mrf.mxu0
        %v645 = vadd.f32 %v421, %v644
        %646 = vmatprep.mubr.bf16.mxu0 0
        %647 = vmatmul.mubr.bf16.gmra.mxu0 %v471
        %v648 = vpop.f32.mrf.mxu0
        %v649 = vadd.f32 %v417, %v648
        %v650 = vpop.f32.mrf.mxu0
        %v651 = vadd.f32 %v421, %v650
        %v652 = vpop.f32.mrf.mxu0
        %v653 = vadd.f32 %v417, %v652
        %v654 = vpop.f32.mrf.mxu0
        %v655 = vadd.f32 %v421, %v654
        %656 = vmatprep.mubr.bf16.mxu0 0
        %657 = vmatmul.mubr.bf16.gmra.mxu0 %v474
        %v658 = vpop.f32.mrf.mxu0
        %v659 = vadd.f32 %v417, %v658
        %v660 = vpop.f32.mrf.mxu0
        %v661 = vadd.f32 %v421, %v660
        %v662 = vpop.f32.mrf.mxu0
        %v663 = vadd.f32 %v417, %v662
        %v664 = vpop.f32.mrf.mxu0
        %v665 = vadd.f32 %v421, %v664
        %666 = vmatprep.mubr.bf16.mxu0 0
        %667 = vmatmul.mubr.bf16.gmra.mxu0 %v477
        %v668 = vpop.f32.mrf.mxu0
        %v669 = vadd.f32 %v417, %v668
        %v670 = vpop.f32.mrf.mxu0
        %v671 = vadd.f32 %v421, %v670
        %v672 = vpop.f32.mrf.mxu0
        %v673 = vadd.f32 %v417, %v672
        %v674 = vpop.f32.mrf.mxu0
        %v675 = vadd.f32 %v421, %v674
        %676 = vmatprep.mubr.bf16.mxu0 0
        %677 = vmatmul.mubr.bf16.gmra.mxu0 %v480
        %v678 = vpop.f32.mrf.mxu0
        %v679 = vadd.f32 %v417, %v678
        %v680 = vpop.f32.mrf.mxu0
        %v681 = vadd.f32 %v421, %v680
        %v682 = vpop.f32.mrf.mxu0
        %v683 = vadd.f32 %v417, %v682
        %v684 = vpop.f32.mrf.mxu0
        %v685 = vadd.f32 %v421, %v684
        %686 = vmatprep.mubr.bf16.mxu0 0
        %687 = vmatmul.mubr.bf16.gmra.mxu0 %v483
        %v688 = vpop.f32.mrf.mxu0
        %v689 = vadd.f32 %v417, %v688
        %v690 = vpop.f32.mrf.mxu0
        %v691 = vadd.f32 %v421, %v690
        %v692 = vpop.f32.mrf.mxu0
        %v693 = vadd.f32 %v417, %v692
        %v694 = vpop.f32.mrf.mxu0
        %v695 = vadd.f32 %v421, %v694
        %696 = vmatprep.mubr.bf16.mxu0 0
        %697 = vmatmul.mubr.bf16.gmra.mxu0 %v486
        %v698 = vpop.f32.mrf.mxu0
        %v699 = vadd.f32 %v417, %v698
        %v700 = vpop.f32.mrf.mxu0
        %v701 = vadd.f32 %v421, %v700
        %v702 = vpop.f32.mrf.mxu0
        %v703 = vadd.f32 %v417, %v702
        %v704 = vpop.f32.mrf.mxu0
        %v705 = vadd.f32 %v421, %v704
        %706 = vmatprep.mubr.bf16.mxu0 0
        %707 = vmatmul.mubr.bf16.gmra.mxu0 %v489
        %v708 = vpop.f32.mrf.mxu0
        %v709 = vadd.f32 %v417, %v708
        %v710 = vpop.f32.mrf.mxu0
        %v711 = vadd.f32 %v421, %v710
        %v712 = vpop.f32.mrf.mxu0
        %v713 = vadd.f32 %v417, %v712
        %v714 = vpop.f32.mrf.mxu0
        %v715 = vadd.f32 %v421, %v714
        %716 = vdwg.mxu0
        %v717 = vpack.c.bf16 %v530, %v526
        %v718 = vpack.c.bf16 %v532, %v528
        %v719 = vpack.c.bf16 %v643, %v639
        %v720 = vpack.c.bf16 %v645, %v641
        %v721 = vpack.c.bf16 %v540, %v536
        %v722 = vpack.c.bf16 %v542, %v538
        %v723 = vpack.c.bf16 %v653, %v649
        %v724 = vpack.c.bf16 %v655, %v651
        %v725 = vpack.c.bf16 %v550, %v546
        %v726 = vpack.c.bf16 %v552, %v548
        %v727 = vpack.c.bf16 %v663, %v659
        %v728 = vpack.c.bf16 %v665, %v661
        %v729 = vpack.c.bf16 %v560, %v556
        %v730 = vpack.c.bf16 %v562, %v558
        %v731 = vpack.c.bf16 %v673, %v669
        %v732 = vpack.c.bf16 %v675, %v671
        %v733 = vpack.c.bf16 %v570, %v566
        %v734 = vpack.c.bf16 %v572, %v568
        %v735 = vpack.c.bf16 %v683, %v679
        %v736 = vpack.c.bf16 %v685, %v681
        %v737 = vpack.c.bf16 %v580, %v576
        %v738 = vpack.c.bf16 %v582, %v578
        %v739 = vpack.c.bf16 %v693, %v689
        %v740 = vpack.c.bf16 %v695, %v691
        %v741 = vpack.c.bf16 %v590, %v586
        %v742 = vpack.c.bf16 %v592, %v588
        %v743 = vpack.c.bf16 %v703, %v699
        %v744 = vpack.c.bf16 %v705, %v701
        %v745 = vpack.c.bf16 %v600, %v596
        %v746 = vpack.c.bf16 %v602, %v598
        %v747 = vpack.c.bf16 %v713, %v709
        %v748 = vpack.c.bf16 %v715, %v711
        %v749 = vtanh.bf16.pop %v717
        %v750 = vtanh.bf16.pop %v718
        %v751 = vtanh.bf16.pop %v719
        %v752 = vtanh.bf16.pop %v720
        %v753 = vtanh.bf16.pop %v721
        %v754 = vtanh.bf16.pop %v722
        %v755 = vtanh.bf16.pop %v723
        %v756 = vtanh.bf16.pop %v724
        %v757 = vtanh.bf16.pop %v725
        %v758 = vtanh.bf16.pop %v726
        %v759 = vtanh.bf16.pop %v727
        %v760 = vtanh.bf16.pop %v728
        %v761 = vtanh.bf16.pop %v729
        %v762 = vtanh.bf16.pop %v730
        %v763 = vtanh.bf16.pop %v731
        %v764 = vtanh.bf16.pop %v732
        %v765 = vtanh.bf16.pop %v733
        %v766 = vtanh.bf16.pop %v734
        %v767 = vtanh.bf16.pop %v735
        %v768 = vtanh.bf16.pop %v736
        %v769 = vtanh.bf16.pop %v737
        %v770 = vtanh.bf16.pop %v738
        %v771 = vtanh.bf16.pop %v739
        %v772 = vtanh.bf16.pop %v740
        %v773 = vtanh.bf16.pop %v741
        %v774 = vtanh.bf16.pop %v742
        %v775 = vtanh.bf16.pop %v743
        %v776 = vtanh.bf16.pop %v744
        %v777 = vtanh.bf16.pop %v745
        %v778 = vtanh.bf16.pop %v746
        %v779 = vtanh.bf16.pop %v747
        %v780 = vtanh.bf16.pop %v748
        %v781 = vld [vmem:[#allocation3] sm:$0xff]
        %v782 = vld [vmem:[#allocation3 + $0x8] sm:$0xff]
        %v783 = vld [vmem:[#allocation3 + $0x10] sm:$0xff]
        %v784 = vld [vmem:[#allocation3 + $0x18] sm:$0xff]
        %v785 = vld [vmem:[#allocation3 + $0x20] sm:$0xff]
        %v786 = vld [vmem:[#allocation3 + $0x28] sm:$0xff]
        %v787 = vld [vmem:[#allocation3 + $0x30] sm:$0xff]
        %v788 = vld [vmem:[#allocation3 + $0x38] sm:$0xff]
        %v789 = vld [vmem:[#allocation3 + $0x40] sm:$0xff]
        %v790 = vld [vmem:[#allocation3 + $0x48] sm:$0xff]
        %v791 = vld [vmem:[#allocation3 + $0x50] sm:$0xff]
        %v792 = vld [vmem:[#allocation3 + $0x58] sm:$0xff]
        %v793 = vld [vmem:[#allocation3 + $0x60] sm:$0xff]
        %v794 = vld [vmem:[#allocation3 + $0x68] sm:$0xff]
        %v795 = vld [vmem:[#allocation3 + $0x70] sm:$0xff]
        %v796 = vld [vmem:[#allocation3 + $0x78] sm:$0xff]
        %v797 = vld [vmem:[#allocation3 + $0x80] sm:$0xff]
        %v798 = vld [vmem:[#allocation3 + $0x88] sm:$0xff]
        %v799 = vld [vmem:[#allocation3 + $0x90] sm:$0xff]
        %v800 = vld [vmem:[#allocation3 + $0x98] sm:$0xff]
        %v801 = vld [vmem:[#allocation3 + $0xa0] sm:$0xff]
        %v802 = vld [vmem:[#allocation3 + $0xa8] sm:$0xff]
        %v803 = vld [vmem:[#allocation3 + $0xb0] sm:$0xff]
        %v804 = vld [vmem:[#allocation3 + $0xb8] sm:$0xff]
        %v805 = vld [vmem:[#allocation3 + $0xc0] sm:$0xff]
        %v806 = vld [vmem:[#allocation3 + $0xc8] sm:$0xff]
        %v807 = vld [vmem:[#allocation3 + $0xd0] sm:$0xff]
        %v808 = vld [vmem:[#allocation3 + $0xd8] sm:$0xff]
        %v809 = vld [vmem:[#allocation3 + $0xe0] sm:$0xff]
        %v810 = vld [vmem:[#allocation3 + $0xe8] sm:$0xff]
        %v811 = vld [vmem:[#allocation3 + $0xf0] sm:$0xff]
        %v812 = vld [vmem:[#allocation3 + $0xf8] sm:$0xff]
        %v813 = vld [vmem:[#allocation3 + $0x100] sm:$0xff]
        %v814 = vld [vmem:[#allocation3 + $0x108] sm:$0xff]
        %v815 = vld [vmem:[#allocation3 + $0x110] sm:$0xff]
        %v816 = vld [vmem:[#allocation3 + $0x118] sm:$0xff]
        %v817 = vld [vmem:[#allocation3 + $0x120] sm:$0xff]
        %v818 = vld [vmem:[#allocation3 + $0x128] sm:$0xff]
        %v819 = vld [vmem:[#allocation3 + $0x130] sm:$0xff]
        %v820 = vld [vmem:[#allocation3 + $0x138] sm:$0xff]
        %v821 = vld [vmem:[#allocation3 + $0x140] sm:$0xff]
        %v822 = vld [vmem:[#allocation3 + $0x148] sm:$0xff]
        %v823 = vld [vmem:[#allocation3 + $0x150] sm:$0xff]
        %v824 = vld [vmem:[#allocation3 + $0x158] sm:$0xff]
        %v825 = vld [vmem:[#allocation3 + $0x160] sm:$0xff]
        %v826 = vld [vmem:[#allocation3 + $0x168] sm:$0xff]
        %v827 = vld [vmem:[#allocation3 + $0x170] sm:$0xff]
        %v828 = vld [vmem:[#allocation3 + $0x178] sm:$0xff]
        %v829 = vld [vmem:[#allocation3 + $0x180] sm:$0xff]
        %v830 = vld [vmem:[#allocation3 + $0x188] sm:$0xff]
        %v831 = vld [vmem:[#allocation3 + $0x190] sm:$0xff]
        %v832 = vld [vmem:[#allocation3 + $0x198] sm:$0xff]
        %v833 = vld [vmem:[#allocation3 + $0x1a0] sm:$0xff]
        %v834 = vld [vmem:[#allocation3 + $0x1a8] sm:$0xff]
        %v835 = vld [vmem:[#allocation3 + $0x1b0] sm:$0xff]
        %v836 = vld [vmem:[#allocation3 + $0x1b8] sm:$0xff]
        %v837 = vld [vmem:[#allocation3 + $0x1c0] sm:$0xff]
        %v838 = vld [vmem:[#allocation3 + $0x1c8] sm:$0xff]
        %v839 = vld [vmem:[#allocation3 + $0x1d0] sm:$0xff]
        %v840 = vld [vmem:[#allocation3 + $0x1d8] sm:$0xff]
        %v841 = vld [vmem:[#allocation3 + $0x1e0] sm:$0xff]
        %v842 = vld [vmem:[#allocation3 + $0x1e8] sm:$0xff]
        %v843 = vld [vmem:[#allocation3 + $0x1f0] sm:$0xff]
        %v844 = vld [vmem:[#allocation3 + $0x1f8] sm:$0xff]
        %v845 = vld [vmem:[%s4] sm:$0x3]
        %v847 = vlaneseq
        %v848 = vshrl.u32 %v847, 7
        %v849 = vsub.s32 0, %v848
        %v850 = vrot.slane %v845, %v849
        %v851 = vlaneseq
        %v852 = vshrl.u32 %v851, 7
        %v853 = vsub.s32 1, %v852
        %v854 = vrot.slane %v845, %v853
        %v921 = vunpack.c.l.b16 %v781
        %v922 = vunpack.c.h.b16 %v781
        %v923 = vunpack.c.l.b16 %v782
        %v924 = vunpack.c.h.b16 %v782
        %v925 = vunpack.c.l.b16 %v783
        %v926 = vunpack.c.h.b16 %v783
        %v927 = vunpack.c.l.b16 %v784
        %v928 = vunpack.c.h.b16 %v784
        %v929 = vunpack.c.l.b16 %v785
        %v930 = vunpack.c.h.b16 %v785
        %v931 = vunpack.c.l.b16 %v786
        %v932 = vunpack.c.h.b16 %v786
        %v933 = vunpack.c.l.b16 %v787
        %v934 = vunpack.c.h.b16 %v787
        %v935 = vunpack.c.l.b16 %v788
        %v936 = vunpack.c.h.b16 %v788
        %v937 = vunpack.c.l.b16 %v789
        %v938 = vunpack.c.h.b16 %v789
        %v939 = vunpack.c.l.b16 %v790
        %v940 = vunpack.c.h.b16 %v790
        %v941 = vunpack.c.l.b16 %v791
        %v942 = vunpack.c.h.b16 %v791
        %v943 = vunpack.c.l.b16 %v792
        %v944 = vunpack.c.h.b16 %v792
        %v945 = vunpack.c.l.b16 %v793
        %v946 = vunpack.c.h.b16 %v793
        %v947 = vunpack.c.l.b16 %v794
        %v948 = vunpack.c.h.b16 %v794
        %v949 = vunpack.c.l.b16 %v795
        %v950 = vunpack.c.h.b16 %v795
        %v951 = vunpack.c.l.b16 %v796
        %v952 = vunpack.c.h.b16 %v796
        %v953 = vunpack.c.l.b16 %v797
        %v954 = vunpack.c.h.b16 %v797
        %v955 = vunpack.c.l.b16 %v798
        %v956 = vunpack.c.h.b16 %v798
        %v957 = vunpack.c.l.b16 %v799
        %v958 = vunpack.c.h.b16 %v799
        %v959 = vunpack.c.l.b16 %v800
        %v960 = vunpack.c.h.b16 %v800
        %v961 = vunpack.c.l.b16 %v801
        %v962 = vunpack.c.h.b16 %v801
        %v963 = vunpack.c.l.b16 %v802
        %v964 = vunpack.c.h.b16 %v802
        %v965 = vunpack.c.l.b16 %v803
        %v966 = vunpack.c.h.b16 %v803
        %v967 = vunpack.c.l.b16 %v804
        %v968 = vunpack.c.h.b16 %v804
        %v969 = vunpack.c.l.b16 %v805
        %v970 = vunpack.c.h.b16 %v805
        %v971 = vunpack.c.l.b16 %v806
        %v972 = vunpack.c.h.b16 %v806
        %v973 = vunpack.c.l.b16 %v807
        %v974 = vunpack.c.h.b16 %v807
        %v975 = vunpack.c.l.b16 %v808
        %v976 = vunpack.c.h.b16 %v808
        %v977 = vunpack.c.l.b16 %v809
        %v978 = vunpack.c.h.b16 %v809
        %v979 = vunpack.c.l.b16 %v810
        %v980 = vunpack.c.h.b16 %v810
        %v981 = vunpack.c.l.b16 %v811
        %v982 = vunpack.c.h.b16 %v811
        %v983 = vunpack.c.l.b16 %v812
        %v984 = vunpack.c.h.b16 %v812
        %v985 = vunpack.c.l.b16 %v813
        %v986 = vunpack.c.h.b16 %v813
        %v987 = vunpack.c.l.b16 %v814
        %v988 = vunpack.c.h.b16 %v814
        %v989 = vunpack.c.l.b16 %v815
        %v990 = vunpack.c.h.b16 %v815
        %v991 = vunpack.c.l.b16 %v816
        %v992 = vunpack.c.h.b16 %v816
        %v993 = vunpack.c.l.b16 %v817
        %v994 = vunpack.c.h.b16 %v817
        %v995 = vunpack.c.l.b16 %v818
        %v996 = vunpack.c.h.b16 %v818
        %v997 = vunpack.c.l.b16 %v819
        %v998 = vunpack.c.h.b16 %v819
        %v999 = vunpack.c.l.b16 %v820
        %v1000 = vunpack.c.h.b16 %v820
        %v1001 = vunpack.c.l.b16 %v821
        %v1002 = vunpack.c.h.b16 %v821
        %v1003 = vunpack.c.l.b16 %v822
        %v1004 = vunpack.c.h.b16 %v822
        %v1005 = vunpack.c.l.b16 %v823
        %v1006 = vunpack.c.h.b16 %v823
        %v1007 = vunpack.c.l.b16 %v824
        %v1008 = vunpack.c.h.b16 %v824
        %v1009 = vunpack.c.l.b16 %v825
        %v1010 = vunpack.c.h.b16 %v825
        %v1011 = vunpack.c.l.b16 %v826
        %v1012 = vunpack.c.h.b16 %v826
        %v1013 = vunpack.c.l.b16 %v827
        %v1014 = vunpack.c.h.b16 %v827
        %v1015 = vunpack.c.l.b16 %v828
        %v1016 = vunpack.c.h.b16 %v828
        %v1017 = vunpack.c.l.b16 %v829
        %v1018 = vunpack.c.h.b16 %v829
        %v1019 = vunpack.c.l.b16 %v830
        %v1020 = vunpack.c.h.b16 %v830
        %v1021 = vunpack.c.l.b16 %v831
        %v1022 = vunpack.c.h.b16 %v831
        %v1023 = vunpack.c.l.b16 %v832
        %v1024 = vunpack.c.h.b16 %v832
        %v1025 = vunpack.c.l.b16 %v833
        %v1026 = vunpack.c.h.b16 %v833
        %v1027 = vunpack.c.l.b16 %v834
        %v1028 = vunpack.c.h.b16 %v834
        %v1029 = vunpack.c.l.b16 %v835
        %v1030 = vunpack.c.h.b16 %v835
        %v1031 = vunpack.c.l.b16 %v836
        %v1032 = vunpack.c.h.b16 %v836
        %v1033 = vunpack.c.l.b16 %v837
        %v1034 = vunpack.c.h.b16 %v837
        %v1035 = vunpack.c.l.b16 %v838
        %v1036 = vunpack.c.h.b16 %v838
        %v1037 = vunpack.c.l.b16 %v839
        %v1038 = vunpack.c.h.b16 %v839
        %v1039 = vunpack.c.l.b16 %v840
        %v1040 = vunpack.c.h.b16 %v840
        %v1041 = vunpack.c.l.b16 %v841
        %v1042 = vunpack.c.h.b16 %v841
        %v1043 = vunpack.c.l.b16 %v842
        %v1044 = vunpack.c.h.b16 %v842
        %v1045 = vunpack.c.l.b16 %v843
        %v1046 = vunpack.c.h.b16 %v843
        %v1047 = vunpack.c.l.b16 %v844
        %v1048 = vunpack.c.h.b16 %v844
        %v1049 = vpack.c.b16 %v923, %v921
        %v1050 = vpack.c.b16 %v924, %v922
        %v1051 = vpack.c.b16 %v927, %v925
        %v1052 = vpack.c.b16 %v928, %v926
        %v1053 = vpack.c.b16 %v931, %v929
        %v1054 = vpack.c.b16 %v932, %v930
        %v1055 = vpack.c.b16 %v935, %v933
        %v1056 = vpack.c.b16 %v936, %v934
        %v1057 = vpack.c.b16 %v939, %v937
        %v1058 = vpack.c.b16 %v940, %v938
        %v1059 = vpack.c.b16 %v943, %v941
        %v1060 = vpack.c.b16 %v944, %v942
        %v1061 = vpack.c.b16 %v947, %v945
        %v1062 = vpack.c.b16 %v948, %v946
        %v1063 = vpack.c.b16 %v951, %v949
        %v1064 = vpack.c.b16 %v952, %v950
        %v1065 = vpack.c.b16 %v955, %v953
        %v1066 = vpack.c.b16 %v956, %v954
        %v1067 = vpack.c.b16 %v959, %v957
        %v1068 = vpack.c.b16 %v960, %v958
        %v1069 = vpack.c.b16 %v963, %v961
        %v1070 = vpack.c.b16 %v964, %v962
        %v1071 = vpack.c.b16 %v967, %v965
        %v1072 = vpack.c.b16 %v968, %v966
        %v1073 = vpack.c.b16 %v971, %v969
        %v1074 = vpack.c.b16 %v972, %v970
        %v1075 = vpack.c.b16 %v975, %v973
        %v1076 = vpack.c.b16 %v976, %v974
        %v1077 = vpack.c.b16 %v979, %v977
        %v1078 = vpack.c.b16 %v980, %v978
        %v1079 = vpack.c.b16 %v983, %v981
        %v1080 = vpack.c.b16 %v984, %v982
        %v1081 = vpack.c.b16 %v987, %v985
        %v1082 = vpack.c.b16 %v988, %v986
        %v1083 = vpack.c.b16 %v991, %v989
        %v1084 = vpack.c.b16 %v992, %v990
        %v1085 = vpack.c.b16 %v995, %v993
        %v1086 = vpack.c.b16 %v996, %v994
        %v1087 = vpack.c.b16 %v999, %v997
        %v1088 = vpack.c.b16 %v1000, %v998
        %v1089 = vpack.c.b16 %v1003, %v1001
        %v1090 = vpack.c.b16 %v1004, %v1002
        %v1091 = vpack.c.b16 %v1007, %v1005
        %v1092 = vpack.c.b16 %v1008, %v1006
        %v1093 = vpack.c.b16 %v1011, %v1009
        %v1094 = vpack.c.b16 %v1012, %v1010
        %v1095 = vpack.c.b16 %v1015, %v1013
        %v1096 = vpack.c.b16 %v1016, %v1014
        %v1097 = vpack.c.b16 %v1019, %v1017
        %v1098 = vpack.c.b16 %v1020, %v1018
        %v1099 = vpack.c.b16 %v1023, %v1021
        %v1100 = vpack.c.b16 %v1024, %v1022
        %v1101 = vpack.c.b16 %v1027, %v1025
        %v1102 = vpack.c.b16 %v1028, %v1026
        %v1103 = vpack.c.b16 %v1031, %v1029
        %v1104 = vpack.c.b16 %v1032, %v1030
        %v1105 = vpack.c.b16 %v1035, %v1033
        %v1106 = vpack.c.b16 %v1036, %v1034
        %v1107 = vpack.c.b16 %v1039, %v1037
        %v1108 = vpack.c.b16 %v1040, %v1038
        %v1109 = vpack.c.b16 %v1043, %v1041
        %v1110 = vpack.c.b16 %v1044, %v1042
        %v1111 = vpack.c.b16 %v1047, %v1045
        %v1112 = vpack.c.b16 %v1048, %v1046
        %1177 = vmatprep.subr.bf16.mxu0 %v1064
        %1178 = vmatpush1.bf16.msra.mxu0 %v1063
        %1179 = vmatprep.subr.bf16.mxu0 %v1062
        %1180 = vmatpush1.bf16.msra.mxu0 %v1061
        %1181 = vmatprep.subr.bf16.mxu0 %v1060
        %1182 = vmatpush1.bf16.msra.mxu0 %v1059
        %1183 = vmatprep.subr.bf16.mxu0 %v1058
        %1184 = vmatpush1.bf16.msra.mxu0 %v1057
        %1185 = vmatprep.subr.bf16.mxu0 %v1056
        %1186 = vmatpush1.bf16.msra.mxu0 %v1055
        %1187 = vmatprep.subr.bf16.mxu0 %v1054
        %1188 = vmatpush1.bf16.msra.mxu0 %v1053
        %1189 = vmatprep.subr.bf16.mxu0 %v1052
        %1190 = vmatpush1.bf16.msra.mxu0 %v1051
        %1191 = vmatprep.subr.bf16.mxu0 %v1050
        %1192 = vmatpush1.bf16.msra.mxu0 %v1049
        %1193 = vmatprep.subr.bf16.mxu0 %v1080
        %1194 = vmatpush2.bf16.msra.mxu0 %v1079
        %1195 = vmatprep.subr.bf16.mxu0 %v1078
        %1196 = vmatpush2.bf16.msra.mxu0 %v1077
        %1197 = vmatprep.subr.bf16.mxu0 %v1076
        %1198 = vmatpush2.bf16.msra.mxu0 %v1075
        %1199 = vmatprep.subr.bf16.mxu0 %v1074
        %1200 = vmatpush2.bf16.msra.mxu0 %v1073
        %1201 = vmatprep.subr.bf16.mxu0 %v1072
        %1202 = vmatpush2.bf16.msra.mxu0 %v1071
        %1203 = vmatprep.subr.bf16.mxu0 %v1070
        %1204 = vmatpush2.bf16.msra.mxu0 %v1069
        %1205 = vmatprep.subr.bf16.mxu0 %v1068
        %1206 = vmatpush2.bf16.msra.mxu0 %v1067
        %1207 = vmatprep.subr.bf16.mxu0 %v1066
        %1208 = vmatpush2.bf16.msra.mxu0 %v1065
        %1209 = vmatprep.mubr.bf16.mxu0 %v750
        %1210 = vmatmul.mubr.bf16.gmra.mxu0 %v749
        %v1211 = vpop.f32.mrf.mxu0
        %v1212 = vadd.f32 %v850, %v1211
        %v1213 = vpop.f32.mrf.mxu0
        %v1214 = vadd.f32 %v854, %v1213
        %v1215 = vpop.f32.mrf.mxu0
        %v1216 = vadd.f32 %v850, %v1215
        %v1217 = vpop.f32.mrf.mxu0
        %v1218 = vadd.f32 %v854, %v1217
        %1219 = vmatprep.mubr.bf16.mxu0 %v754
        %1220 = vmatmul.mubr.bf16.gmra.mxu0 %v753
        %v1221 = vpop.f32.mrf.mxu0
        %v1222 = vadd.f32 %v850, %v1221
        %v1223 = vpop.f32.mrf.mxu0
        %v1224 = vadd.f32 %v854, %v1223
        %v1225 = vpop.f32.mrf.mxu0
        %v1226 = vadd.f32 %v850, %v1225
        %v1227 = vpop.f32.mrf.mxu0
        %v1228 = vadd.f32 %v854, %v1227
        %1229 = vmatprep.mubr.bf16.mxu0 %v758
        %1230 = vmatmul.mubr.bf16.gmra.mxu0 %v757
        %v1231 = vpop.f32.mrf.mxu0
        %v1232 = vadd.f32 %v850, %v1231
        %v1233 = vpop.f32.mrf.mxu0
        %v1234 = vadd.f32 %v854, %v1233
        %v1235 = vpop.f32.mrf.mxu0
        %v1236 = vadd.f32 %v850, %v1235
        %v1237 = vpop.f32.mrf.mxu0
        %v1238 = vadd.f32 %v854, %v1237
        %1239 = vmatprep.mubr.bf16.mxu0 %v762
        %1240 = vmatmul.mubr.bf16.gmra.mxu0 %v761
        %v1241 = vpop.f32.mrf.mxu0
        %v1242 = vadd.f32 %v850, %v1241
        %v1243 = vpop.f32.mrf.mxu0
        %v1244 = vadd.f32 %v854, %v1243
        %v1245 = vpop.f32.mrf.mxu0
        %v1246 = vadd.f32 %v850, %v1245
        %v1247 = vpop.f32.mrf.mxu0
        %v1248 = vadd.f32 %v854, %v1247
        %1249 = vmatprep.mubr.bf16.mxu0 %v766
        %1250 = vmatmul.mubr.bf16.gmra.mxu0 %v765
        %v1251 = vpop.f32.mrf.mxu0
        %v1252 = vadd.f32 %v850, %v1251
        %v1253 = vpop.f32.mrf.mxu0
        %v1254 = vadd.f32 %v854, %v1253
        %v1255 = vpop.f32.mrf.mxu0
        %v1256 = vadd.f32 %v850, %v1255
        %v1257 = vpop.f32.mrf.mxu0
        %v1258 = vadd.f32 %v854, %v1257
        %1259 = vmatprep.mubr.bf16.mxu0 %v770
        %1260 = vmatmul.mubr.bf16.gmra.mxu0 %v769
        %v1261 = vpop.f32.mrf.mxu0
        %v1262 = vadd.f32 %v850, %v1261
        %v1263 = vpop.f32.mrf.mxu0
        %v1264 = vadd.f32 %v854, %v1263
        %v1265 = vpop.f32.mrf.mxu0
        %v1266 = vadd.f32 %v850, %v1265
        %v1267 = vpop.f32.mrf.mxu0
        %v1268 = vadd.f32 %v854, %v1267
        %1269 = vmatprep.mubr.bf16.mxu0 %v774
        %1270 = vmatmul.mubr.bf16.gmra.mxu0 %v773
        %v1271 = vpop.f32.mrf.mxu0
        %v1272 = vadd.f32 %v850, %v1271
        %v1273 = vpop.f32.mrf.mxu0
        %v1274 = vadd.f32 %v854, %v1273
        %v1275 = vpop.f32.mrf.mxu0
        %v1276 = vadd.f32 %v850, %v1275
        %v1277 = vpop.f32.mrf.mxu0
        %v1278 = vadd.f32 %v854, %v1277
        %1279 = vmatprep.mubr.bf16.mxu0 %v778
        %1280 = vmatmul.mubr.bf16.gmra.mxu0 %v777
        %v1281 = vpop.f32.mrf.mxu0
        %v1282 = vadd.f32 %v850, %v1281
        %v1283 = vpop.f32.mrf.mxu0
        %v1284 = vadd.f32 %v854, %v1283
        %v1285 = vpop.f32.mrf.mxu0
        %v1286 = vadd.f32 %v850, %v1285
        %v1287 = vpop.f32.mrf.mxu0
        %v1288 = vadd.f32 %v854, %v1287
        %1289 = vdwg.mxu0
        %1290 = vmatprep.subr.bf16.mxu0 %v1096
        %1291 = vmatpush1.bf16.msra.mxu0 %v1095
        %1292 = vmatprep.subr.bf16.mxu0 %v1094
        %1293 = vmatpush1.bf16.msra.mxu0 %v1093
        %1294 = vmatprep.subr.bf16.mxu0 %v1092
        %1295 = vmatpush1.bf16.msra.mxu0 %v1091
        %1296 = vmatprep.subr.bf16.mxu0 %v1090
        %1297 = vmatpush1.bf16.msra.mxu0 %v1089
        %1298 = vmatprep.subr.bf16.mxu0 %v1088
        %1299 = vmatpush1.bf16.msra.mxu0 %v1087
        %1300 = vmatprep.subr.bf16.mxu0 %v1086
        %1301 = vmatpush1.bf16.msra.mxu0 %v1085
        %1302 = vmatprep.subr.bf16.mxu0 %v1084
        %1303 = vmatpush1.bf16.msra.mxu0 %v1083
        %1304 = vmatprep.subr.bf16.mxu0 %v1082
        %1305 = vmatpush1.bf16.msra.mxu0 %v1081
        %1306 = vmatprep.subr.bf16.mxu0 %v1112
        %1307 = vmatpush2.bf16.msra.mxu0 %v1111
        %1308 = vmatprep.subr.bf16.mxu0 %v1110
        %1309 = vmatpush2.bf16.msra.mxu0 %v1109
        %1310 = vmatprep.subr.bf16.mxu0 %v1108
        %1311 = vmatpush2.bf16.msra.mxu0 %v1107
        %1312 = vmatprep.subr.bf16.mxu0 %v1106
        %1313 = vmatpush2.bf16.msra.mxu0 %v1105
        %1314 = vmatprep.subr.bf16.mxu0 %v1104
        %1315 = vmatpush2.bf16.msra.mxu0 %v1103
        %1316 = vmatprep.subr.bf16.mxu0 %v1102
        %1317 = vmatpush2.bf16.msra.mxu0 %v1101
        %1318 = vmatprep.subr.bf16.mxu0 %v1100
        %1319 = vmatpush2.bf16.msra.mxu0 %v1099
        %1320 = vmatprep.subr.bf16.mxu0 %v1098
        %1321 = vmatpush2.bf16.msra.mxu0 %v1097
        %1322 = vmatprep.mubr.bf16.mxu0 %v752
        %1323 = vmatmul.mubr.bf16.gmra.mxu0 %v751
        %v1324 = vpop.f32.mrf.mxu0
        %v1325 = vadd.f32 %v1212, %v1324
        %v1326 = vpop.f32.mrf.mxu0
        %v1327 = vadd.f32 %v1214, %v1326
        %v1328 = vpop.f32.mrf.mxu0
        %v1329 = vadd.f32 %v1216, %v1328
        %v1330 = vpop.f32.mrf.mxu0
        %v1331 = vadd.f32 %v1218, %v1330
        %1332 = vmatprep.mubr.bf16.mxu0 %v756
        %1333 = vmatmul.mubr.bf16.gmra.mxu0 %v755
        %v1334 = vpop.f32.mrf.mxu0
        %v1335 = vadd.f32 %v1222, %v1334
        %v1336 = vpop.f32.mrf.mxu0
        %v1337 = vadd.f32 %v1224, %v1336
        %v1338 = vpop.f32.mrf.mxu0
        %v1339 = vadd.f32 %v1226, %v1338
        %v1340 = vpop.f32.mrf.mxu0
        %v1341 = vadd.f32 %v1228, %v1340
        %1342 = vmatprep.mubr.bf16.mxu0 %v760
        %1343 = vmatmul.mubr.bf16.gmra.mxu0 %v759
        %v1344 = vpop.f32.mrf.mxu0
        %v1345 = vadd.f32 %v1232, %v1344
        %v1346 = vpop.f32.mrf.mxu0
        %v1347 = vadd.f32 %v1234, %v1346
        %v1348 = vpop.f32.mrf.mxu0
        %v1349 = vadd.f32 %v1236, %v1348
        %v1350 = vpop.f32.mrf.mxu0
        %v1351 = vadd.f32 %v1238, %v1350
        %1352 = vmatprep.mubr.bf16.mxu0 %v764
        %1353 = vmatmul.mubr.bf16.gmra.mxu0 %v763
        %v1354 = vpop.f32.mrf.mxu0
        %v1355 = vadd.f32 %v1242, %v1354
        %v1356 = vpop.f32.mrf.mxu0
        %v1357 = vadd.f32 %v1244, %v1356
        %v1358 = vpop.f32.mrf.mxu0
        %v1359 = vadd.f32 %v1246, %v1358
        %v1360 = vpop.f32.mrf.mxu0
        %v1361 = vadd.f32 %v1248, %v1360
        %1362 = vmatprep.mubr.bf16.mxu0 %v768
        %1363 = vmatmul.mubr.bf16.gmra.mxu0 %v767
        %v1364 = vpop.f32.mrf.mxu0
        %v1365 = vadd.f32 %v1252, %v1364
        %v1366 = vpop.f32.mrf.mxu0
        %v1367 = vadd.f32 %v1254, %v1366
        %v1368 = vpop.f32.mrf.mxu0
        %v1369 = vadd.f32 %v1256, %v1368
        %v1370 = vpop.f32.mrf.mxu0
        %v1371 = vadd.f32 %v1258, %v1370
        %1372 = vmatprep.mubr.bf16.mxu0 %v772
        %1373 = vmatmul.mubr.bf16.gmra.mxu0 %v771
        %v1374 = vpop.f32.mrf.mxu0
        %v1375 = vadd.f32 %v1262, %v1374
        %v1376 = vpop.f32.mrf.mxu0
        %v1377 = vadd.f32 %v1264, %v1376
        %v1378 = vpop.f32.mrf.mxu0
        %v1379 = vadd.f32 %v1266, %v1378
        %v1380 = vpop.f32.mrf.mxu0
        %v1381 = vadd.f32 %v1268, %v1380
        %1382 = vmatprep.mubr.bf16.mxu0 %v776
        %1383 = vmatmul.mubr.bf16.gmra.mxu0 %v775
        %v1384 = vpop.f32.mrf.mxu0
        %v1385 = vadd.f32 %v1272, %v1384
        %v1386 = vpop.f32.mrf.mxu0
        %v1387 = vadd.f32 %v1274, %v1386
        %v1388 = vpop.f32.mrf.mxu0
        %v1389 = vadd.f32 %v1276, %v1388
        %v1390 = vpop.f32.mrf.mxu0
        %v1391 = vadd.f32 %v1278, %v1390
        %1392 = vmatprep.mubr.bf16.mxu0 %v780
        %1393 = vmatmul.mubr.bf16.gmra.mxu0 %v779
        %v1394 = vpop.f32.mrf.mxu0
        %v1395 = vadd.f32 %v1282, %v1394
        %v1396 = vpop.f32.mrf.mxu0
        %v1397 = vadd.f32 %v1284, %v1396
        %v1398 = vpop.f32.mrf.mxu0
        %v1399 = vadd.f32 %v1286, %v1398
        %v1400 = vpop.f32.mrf.mxu0
        %v1401 = vadd.f32 %v1288, %v1400
        %1402 = vdwg.mxu0
        %v1403 = vpack.c.bf16 %v1329, %v1325
        %v1404 = vpack.c.bf16 %v1331, %v1327
        %v1405 = vpack.c.bf16 %v1339, %v1335
        %v1406 = vpack.c.bf16 %v1341, %v1337
        %v1407 = vpack.c.bf16 %v1349, %v1345
        %v1408 = vpack.c.bf16 %v1351, %v1347
        %v1409 = vpack.c.bf16 %v1359, %v1355
        %v1410 = vpack.c.bf16 %v1361, %v1357
        %v1411 = vpack.c.bf16 %v1369, %v1365
        %v1412 = vpack.c.bf16 %v1371, %v1367
        %v1413 = vpack.c.bf16 %v1379, %v1375
        %v1414 = vpack.c.bf16 %v1381, %v1377
        %v1415 = vpack.c.bf16 %v1389, %v1385
        %v1416 = vpack.c.bf16 %v1391, %v1387
        %v1417 = vpack.c.bf16 %v1399, %v1395
        %v1418 = vpack.c.bf16 %v1401, %v1397
        %v1419 = vtanh.bf16.pop %v1403
        %v1420 = vtanh.bf16.pop %v1404
        %v1421 = vtanh.bf16.pop %v1405
        %v1422 = vtanh.bf16.pop %v1406
        %v1423 = vtanh.bf16.pop %v1407
        %v1424 = vtanh.bf16.pop %v1408
        %v1425 = vtanh.bf16.pop %v1409
        %v1426 = vtanh.bf16.pop %v1410
        %v1427 = vtanh.bf16.pop %v1411
        %v1428 = vtanh.bf16.pop %v1412
        %v1429 = vtanh.bf16.pop %v1413
        %v1430 = vtanh.bf16.pop %v1414
        %v1431 = vtanh.bf16.pop %v1415
        %v1432 = vtanh.bf16.pop %v1416
        %v1433 = vtanh.bf16.pop %v1417
        %v1434 = vtanh.bf16.pop %v1418
        %v1435 = vld [vmem:[%s5] sm:$0xf]
        %v1436 = vld [vmem:[%s5 + $0x4] sm:$0xf]
        %v1437 = vld [vmem:[%s5 + $0x8] sm:$0xf]
        %v1438 = vld [vmem:[%s5 + $0xc] sm:$0xf]
        %v1439 = vld [vmem:[%s5 + $0x10] sm:$0xf]
        %v1440 = vld [vmem:[%s5 + $0x14] sm:$0xf]
        %v1441 = vld [vmem:[%s5 + $0x18] sm:$0xf]
        %v1442 = vld [vmem:[%s5 + $0x1c] sm:$0xf]
        %v1443 = vld [vmem:[%s5 + $0x20] sm:$0xf]
        %v1444 = vld [vmem:[%s5 + $0x24] sm:$0xf]
        %v1445 = vld [vmem:[%s5 + $0x28] sm:$0xf]
        %v1446 = vld [vmem:[%s5 + $0x2c] sm:$0xf]
        %v1447 = vld [vmem:[%s5 + $0x30] sm:$0xf]
        %v1448 = vld [vmem:[%s5 + $0x34] sm:$0xf]
        %v1449 = vld [vmem:[%s5 + $0x38] sm:$0xf]
        %v1450 = vld [vmem:[%s5 + $0x3c] sm:$0xf]
        %v1451 = vld [vmem:[%s5 + $0x40] sm:$0xf]
        %v1452 = vld [vmem:[%s5 + $0x44] sm:$0xf]
        %v1453 = vld [vmem:[%s5 + $0x48] sm:$0xf]
        %v1454 = vld [vmem:[%s5 + $0x4c] sm:$0xf]
        %v1455 = vld [vmem:[%s5 + $0x50] sm:$0xf]
        %v1456 = vld [vmem:[%s5 + $0x54] sm:$0xf]
        %v1457 = vld [vmem:[%s5 + $0x58] sm:$0xf]
        %v1458 = vld [vmem:[%s5 + $0x5c] sm:$0xf]
        %v1459 = vld [vmem:[%s5 + $0x60] sm:$0xf]
        %v1460 = vld [vmem:[%s5 + $0x64] sm:$0xf]
        %v1461 = vld [vmem:[%s5 + $0x68] sm:$0xf]
        %v1462 = vld [vmem:[%s5 + $0x6c] sm:$0xf]
        %v1463 = vld [vmem:[%s5 + $0x70] sm:$0xf]
        %v1464 = vld [vmem:[%s5 + $0x74] sm:$0xf]
        %v1465 = vld [vmem:[%s5 + $0x78] sm:$0xf]
        %v1466 = vld [vmem:[%s5 + $0x7c] sm:$0xf]
        %v1467 = vld [vmem:[%s6] sm:$0x1]
        %v1469 = vlaneseq
        %v1470 = vshrl.u32 %v1469, 7
        %v1471 = vsub.s32 0, %v1470
        %v1472 = vrot.slane %v1467, %v1471
        %v1506 = vunpack.c.l.b16 %v1435
        %v1507 = vunpack.c.l.b16 %v1436
        %v1508 = vunpack.c.l.b16 %v1437
        %v1509 = vunpack.c.l.b16 %v1438
        %v1510 = vunpack.c.l.b16 %v1439
        %v1511 = vunpack.c.l.b16 %v1440
        %v1512 = vunpack.c.l.b16 %v1441
        %v1513 = vunpack.c.l.b16 %v1442
        %v1514 = vunpack.c.l.b16 %v1443
        %v1515 = vunpack.c.l.b16 %v1444
        %v1516 = vunpack.c.l.b16 %v1445
        %v1517 = vunpack.c.l.b16 %v1446
        %v1518 = vunpack.c.l.b16 %v1447
        %v1519 = vunpack.c.l.b16 %v1448
        %v1520 = vunpack.c.l.b16 %v1449
        %v1521 = vunpack.c.l.b16 %v1450
        %v1522 = vunpack.c.l.b16 %v1451
        %v1523 = vunpack.c.l.b16 %v1452
        %v1524 = vunpack.c.l.b16 %v1453
        %v1525 = vunpack.c.l.b16 %v1454
        %v1526 = vunpack.c.l.b16 %v1455
        %v1527 = vunpack.c.l.b16 %v1456
        %v1528 = vunpack.c.l.b16 %v1457
        %v1529 = vunpack.c.l.b16 %v1458
        %v1530 = vunpack.c.l.b16 %v1459
        %v1531 = vunpack.c.l.b16 %v1460
        %v1532 = vunpack.c.l.b16 %v1461
        %v1533 = vunpack.c.l.b16 %v1462
        %v1534 = vunpack.c.l.b16 %v1463
        %v1535 = vunpack.c.l.b16 %v1464
        %v1536 = vunpack.c.l.b16 %v1465
        %v1537 = vunpack.c.l.b16 %v1466
        %v1538 = vpack.c.b16 %v1507, %v1506
        %v1539 = vpack.c.b16 %v1509, %v1508
        %v1540 = vpack.c.b16 %v1511, %v1510
        %v1541 = vpack.c.b16 %v1513, %v1512
        %v1542 = vpack.c.b16 %v1515, %v1514
        %v1543 = vpack.c.b16 %v1517, %v1516
        %v1544 = vpack.c.b16 %v1519, %v1518
        %v1545 = vpack.c.b16 %v1521, %v1520
        %v1546 = vpack.c.b16 %v1523, %v1522
        %v1547 = vpack.c.b16 %v1525, %v1524
        %v1548 = vpack.c.b16 %v1527, %v1526
        %v1549 = vpack.c.b16 %v1529, %v1528
        %v1550 = vpack.c.b16 %v1531, %v1530
        %v1551 = vpack.c.b16 %v1533, %v1532
        %v1552 = vpack.c.b16 %v1535, %v1534
        %v1553 = vpack.c.b16 %v1537, %v1536
        %1570 = vmatprep.subr.bf16.mxu0 0
        %1571 = vmatpush1.bf16.msra.mxu0 %v1545
        %1572 = vmatprep.subr.bf16.mxu0 0
        %1573 = vmatpush1.bf16.msra.mxu0 %v1544
        %1574 = vmatprep.subr.bf16.mxu0 0
        %1575 = vmatpush1.bf16.msra.mxu0 %v1543
        %1576 = vmatprep.subr.bf16.mxu0 0
        %1577 = vmatpush1.bf16.msra.mxu0 %v1542
        %1578 = vmatprep.subr.bf16.mxu0 0
        %1579 = vmatpush1.bf16.msra.mxu0 %v1541
        %1580 = vmatprep.subr.bf16.mxu0 0
        %1581 = vmatpush1.bf16.msra.mxu0 %v1540
        %1582 = vmatprep.subr.bf16.mxu0 0
        %1583 = vmatpush1.bf16.msra.mxu0 %v1539
        %1584 = vmatprep.subr.bf16.mxu0 0
        %1585 = vmatpush1.bf16.msra.mxu0 %v1538
        %1586 = vmatprep.subr.bf16.mxu0 0
        %1587 = vmatpush2.bf16.msra.mxu0 %v1553
        %1588 = vmatprep.subr.bf16.mxu0 0
        %1589 = vmatpush2.bf16.msra.mxu0 %v1552
        %1590 = vmatprep.subr.bf16.mxu0 0
        %1591 = vmatpush2.bf16.msra.mxu0 %v1551
        %1592 = vmatprep.subr.bf16.mxu0 0
        %1593 = vmatpush2.bf16.msra.mxu0 %v1550
        %1594 = vmatprep.subr.bf16.mxu0 0
        %1595 = vmatpush2.bf16.msra.mxu0 %v1549
        %1596 = vmatprep.subr.bf16.mxu0 0
        %1597 = vmatpush2.bf16.msra.mxu0 %v1548
        %1598 = vmatprep.subr.bf16.mxu0 0
        %1599 = vmatpush2.bf16.msra.mxu0 %v1547
        %1600 = vmatprep.subr.bf16.mxu0 0
        %1601 = vmatpush2.bf16.msra.mxu0 %v1546
        %1602 = vmatprep.mubr.bf16.mxu0 %v1420
        %1603 = vmatmul.mubr.bf16.gmra.mxu0 %v1419
        %v1604 = vpop.f32.mrf.mxu0
        %v1605 = vadd.f32 %v1472, %v1604
        %v1606 = vpop.f32.mrf.mxu0
        %v1607 = vpop.f32.mrf.mxu0
        %v1608 = vadd.f32 %v1472, %v1607
        %v1609 = vpop.f32.mrf.mxu0
        %1610 = vmatprep.mubr.bf16.mxu0 %v1422
        %1611 = vmatmul.mubr.bf16.gmra.mxu0 %v1421
        %v1612 = vpop.f32.mrf.mxu0
        %v1613 = vadd.f32 %v1472, %v1612
        %v1614 = vpop.f32.mrf.mxu0
        %v1615 = vpop.f32.mrf.mxu0
        %v1616 = vadd.f32 %v1472, %v1615
        %v1617 = vpop.f32.mrf.mxu0
        %1618 = vmatprep.mubr.bf16.mxu0 %v1424
        %1619 = vmatmul.mubr.bf16.gmra.mxu0 %v1423
        %v1620 = vpop.f32.mrf.mxu0
        %v1621 = vadd.f32 %v1472, %v1620
        %v1622 = vpop.f32.mrf.mxu0
        %v1623 = vpop.f32.mrf.mxu0
        %v1624 = vadd.f32 %v1472, %v1623
        %v1625 = vpop.f32.mrf.mxu0
        %1626 = vmatprep.mubr.bf16.mxu0 %v1426
        %1627 = vmatmul.mubr.bf16.gmra.mxu0 %v1425
        %v1628 = vpop.f32.mrf.mxu0
        %v1629 = vadd.f32 %v1472, %v1628
        %v1630 = vpop.f32.mrf.mxu0
        %v1631 = vpop.f32.mrf.mxu0
        %v1632 = vadd.f32 %v1472, %v1631
        %v1633 = vpop.f32.mrf.mxu0
        %1634 = vmatprep.mubr.bf16.mxu0 %v1428
        %1635 = vmatmul.mubr.bf16.gmra.mxu0 %v1427
        %v1636 = vpop.f32.mrf.mxu0
        %v1637 = vadd.f32 %v1472, %v1636
        %v1638 = vpop.f32.mrf.mxu0
        %v1639 = vpop.f32.mrf.mxu0
        %v1640 = vadd.f32 %v1472, %v1639
        %v1641 = vpop.f32.mrf.mxu0
        %1642 = vmatprep.mubr.bf16.mxu0 %v1430
        %1643 = vmatmul.mubr.bf16.gmra.mxu0 %v1429
        %v1644 = vpop.f32.mrf.mxu0
        %v1645 = vadd.f32 %v1472, %v1644
        %v1646 = vpop.f32.mrf.mxu0
        %v1647 = vpop.f32.mrf.mxu0
        %v1648 = vadd.f32 %v1472, %v1647
        %v1649 = vpop.f32.mrf.mxu0
        %1650 = vmatprep.mubr.bf16.mxu0 %v1432
        %1651 = vmatmul.mubr.bf16.gmra.mxu0 %v1431
        %v1652 = vpop.f32.mrf.mxu0
        %v1653 = vadd.f32 %v1472, %v1652
        %v1654 = vpop.f32.mrf.mxu0
        %v1655 = vpop.f32.mrf.mxu0
        %v1656 = vadd.f32 %v1472, %v1655
        %v1657 = vpop.f32.mrf.mxu0
        %1658 = vmatprep.mubr.bf16.mxu0 %v1434
        %1659 = vmatmul.mubr.bf16.gmra.mxu0 %v1433
        %v1660 = vpop.f32.mrf.mxu0
        %v1661 = vadd.f32 %v1472, %v1660
        %v1662 = vpop.f32.mrf.mxu0
        %v1663 = vpop.f32.mrf.mxu0
        %v1664 = vadd.f32 %v1472, %v1663
        %v1665 = vpop.f32.mrf.mxu0
        %1666 = vdwg.mxu0
        %v1667 = vpack.c.bf16 %v1608, %v1605
        %v1668 = vpack.c.bf16 %v1616, %v1613
        %v1669 = vpack.c.bf16 %v1624, %v1621
        %v1670 = vpack.c.bf16 %v1632, %v1629
        %v1671 = vpack.c.bf16 %v1640, %v1637
        %v1672 = vpack.c.bf16 %v1648, %v1645
        %v1673 = vpack.c.bf16 %v1656, %v1653
        %v1674 = vpack.c.bf16 %v1664, %v1661
        %v1675 = vtanh.bf16.pop %v1667
        %v1676 = vtanh.bf16.pop %v1668
        %v1677 = vtanh.bf16.pop %v1669
        %v1678 = vtanh.bf16.pop %v1670
        %v1679 = vtanh.bf16.pop %v1671
        %v1680 = vtanh.bf16.pop %v1672
        %v1681 = vtanh.bf16.pop %v1673
        %v1682 = vtanh.bf16.pop %v1674
        %v1683 = vunpack.c.l.bf16 %v1675
        %v1684 = vunpack.c.h.bf16 %v1675
        %v1685 = vunpack.c.l.bf16 %v1676
        %v1686 = vunpack.c.h.bf16 %v1676
        %v1687 = vunpack.c.l.bf16 %v1677
        %v1688 = vunpack.c.h.bf16 %v1677
        %v1689 = vunpack.c.l.bf16 %v1678
        %v1690 = vunpack.c.h.bf16 %v1678
        %v1691 = vunpack.c.l.bf16 %v1679
        %v1692 = vunpack.c.h.bf16 %v1679
        %v1693 = vunpack.c.l.bf16 %v1680
        %v1694 = vunpack.c.h.bf16 %v1680
        %v1695 = vunpack.c.l.bf16 %v1681
        %v1696 = vunpack.c.h.bf16 %v1681
        %v1697 = vunpack.c.l.bf16 %v1682
        %v1698 = vunpack.c.h.bf16 %v1682
        %v1699 = vld [vmem:[%s7] sm:$0x1]
        %v1701 = vlaneseq
        %v1702 = vshrl.u32 %v1701, 7
        %v1703 = vsub.s32 0, %v1702
        %v1704 = vrot.slane %v1699, %v1703
        %v1706 = vmul.f32 %v1683, %v1704
        %v1707 = vmul.f32 %v1684, %v1704
        %v1708 = vmul.f32 %v1685, %v1704
        %v1709 = vmul.f32 %v1686, %v1704
        %v1710 = vmul.f32 %v1687, %v1704
        %v1711 = vmul.f32 %v1688, %v1704
        %v1712 = vmul.f32 %v1689, %v1704
        %v1713 = vmul.f32 %v1690, %v1704
        %v1714 = vmul.f32 %v1691, %v1704
        %v1715 = vmul.f32 %v1692, %v1704
        %v1716 = vmul.f32 %v1693, %v1704
        %v1717 = vmul.f32 %v1694, %v1704
        %v1718 = vmul.f32 %v1695, %v1704
        %v1719 = vmul.f32 %v1696, %v1704
        %v1720 = vmul.f32 %v1697, %v1704
        %v1721 = vmul.f32 %v1698, %v1704
        %1722 = vadd.xlane.f32.xlu0 %v1706
        %v1723 = vpop.xlane.xlu0 %1722
        %1724 = vadd.xlane.f32.xlu0 %v1707
        %v1725 = vpop.xlane.xlu0 %1724
        %1726 = vadd.xlane.f32.xlu0 %v1708
        %v1727 = vpop.xlane.xlu0 %1726
        %1728 = vadd.xlane.f32.xlu0 %v1709
        %v1729 = vpop.xlane.xlu0 %1728
        %1730 = vadd.xlane.f32.xlu0 %v1710
        %v1731 = vpop.xlane.xlu0 %1730
        %1732 = vadd.xlane.f32.xlu0 %v1711
        %v1733 = vpop.xlane.xlu0 %1732
        %1734 = vadd.xlane.f32.xlu0 %v1712
        %v1735 = vpop.xlane.xlu0 %1734
        %1736 = vadd.xlane.f32.xlu0 %v1713
        %v1737 = vpop.xlane.xlu0 %1736
        %1738 = vadd.xlane.f32.xlu0 %v1714
        %v1739 = vpop.xlane.xlu0 %1738
        %1740 = vadd.xlane.f32.xlu0 %v1715
        %v1741 = vpop.xlane.xlu0 %1740
        %1742 = vadd.xlane.f32.xlu0 %v1716
        %v1743 = vpop.xlane.xlu0 %1742
        %1744 = vadd.xlane.f32.xlu0 %v1717
        %v1745 = vpop.xlane.xlu0 %1744
        %1746 = vadd.xlane.f32.xlu0 %v1718
        %v1747 = vpop.xlane.xlu0 %1746
        %1748 = vadd.xlane.f32.xlu0 %v1719
        %v1749 = vpop.xlane.xlu0 %1748
        %1750 = vadd.xlane.f32.xlu0 %v1720
        %v1751 = vpop.xlane.xlu0 %1750
        %1752 = vadd.xlane.f32.xlu0 %v1721
        %v1753 = vpop.xlane.xlu0 %1752
        %v1754 = vld [vmem:[#allocation2] sm:$0x1]
        %v1756 = vlaneseq
        %v1757 = vshrl.u32 %v1756, 7
        %v1758 = vsub.s32 0, %v1757
        %v1759 = vrot.slane %v1754, %v1758
        %v1761 = vadd.f32 %v1723, %v1759
        %v1762 = vadd.f32 %v1725, %v1759
        %v1763 = vadd.f32 %v1727, %v1759
        %v1764 = vadd.f32 %v1729, %v1759
        %v1765 = vadd.f32 %v1731, %v1759
        %v1766 = vadd.f32 %v1733, %v1759
        %v1767 = vadd.f32 %v1735, %v1759
        %v1768 = vadd.f32 %v1737, %v1759
        %v1769 = vadd.f32 %v1739, %v1759
        %v1770 = vadd.f32 %v1741, %v1759
        %v1771 = vadd.f32 %v1743, %v1759
        %v1772 = vadd.f32 %v1745, %v1759
        %v1773 = vadd.f32 %v1747, %v1759
        %v1774 = vadd.f32 %v1749, %v1759
        %v1775 = vadd.f32 %v1751, %v1759
        %v1776 = vadd.f32 %v1753, %v1759
        %vm1777 = vcmask 7168
        %1778 = vst.msk [vmem:[%s351] sm:$0xff] %vm1777, %v1761
        %1779 = vst.msk [vmem:[%s351 + $0x8] sm:$0xff] %vm1777, %v1762
        %1780 = vst.msk [vmem:[%s351 + $0x10] sm:$0xff] %vm1777, %v1763
        %1781 = vst.msk [vmem:[%s351 + $0x18] sm:$0xff] %vm1777, %v1764
        %1782 = vst.msk [vmem:[%s351 + $0x20] sm:$0xff] %vm1777, %v1765
        %1783 = vst.msk [vmem:[%s351 + $0x28] sm:$0xff] %vm1777, %v1766
        %1784 = vst.msk [vmem:[%s351 + $0x30] sm:$0xff] %vm1777, %v1767
        %1785 = vst.msk [vmem:[%s351 + $0x38] sm:$0xff] %vm1777, %v1768
        %1786 = vst.msk [vmem:[%s351 + $0x40] sm:$0xff] %vm1777, %v1769
        %1787 = vst.msk [vmem:[%s351 + $0x48] sm:$0xff] %vm1777, %v1770
        %1788 = vst.msk [vmem:[%s351 + $0x50] sm:$0xff] %vm1777, %v1771
        %1789 = vst.msk [vmem:[%s351 + $0x58] sm:$0xff] %vm1777, %v1772
        %1790 = vst.msk [vmem:[%s351 + $0x60] sm:$0xff] %vm1777, %v1773
        %1791 = vst.msk [vmem:[%s351 + $0x68] sm:$0xff] %vm1777, %v1774
        %1792 = vst.msk [vmem:[%s351 + $0x70] sm:$0xff] %vm1777, %v1775
        %1793 = vst.msk [vmem:[%s351 + $0x78] sm:$0xff] %vm1777, %v1776
        %s1794 = sand.u32 %s225, 1
        %s1795 = sand.u32 %s225, 1
        %s1796 = smul.addr %s1795, 128
        %s1797 = scalar_lea.vmem [#allocation5], %s1796
        // Predicated region
        $region61: #{nn_forward.1} parent=55 // pred_check
          %p1798 = pneg %p235
        $region62: #{nn_forward.1} parent=55 // pred_check_branch
          %1800 = sbr.rel (%p1798) target = $region64
        $region63: #{nn_forward.1} parent=55 // pred_region
          %s1801 = smul.u32 16, %s23
          %s1802 = ssub.s32 25, %s1801
          %p1803 = scmp.lt.s32.totalorder %s1802, 16
          %s1804 = scalar_select %p1803, %s1802, 16
          %s1805 = smul.u32 128, %s1804
          %p1806 = scmp.ne.s32.totalorder 0, %s1805
          %s1807 = smul.addr %s1801, 8
          %s1808 = scalar_lea.vmem %s9, %s1807
          // Predicated region
          $region65: #{nn_forward.1} parent=63 // pred_check
            %p1809 = pneg %p1806
          $region66: #{nn_forward.1} parent=63 // pred_check_branch
            %1811 = sbr.rel (%p1809) target = $region68
          $region67: #{nn_forward.1} parent=63 // pred_region
            // Predicated region
            $region69: #{nn_forward.1} parent=67 // pred_check
              _
            $region70: #{nn_forward.1} parent=67 // pred_check_branch
              %1813 = sbr.rel (0) target = $region72
            $region71: #{nn_forward.1} parent=67 // pred_region
              // Predicated region
              $region91: #{nn_forward.1} parent=71 // pred_check
                _
              $region92: #{nn_forward.1} parent=71 // pred_check_branch
                %1893 = sbr.rel (0) target = $region94
              $region93: #{nn_forward.1} parent=71 // pred_region
                %s1894 = sshrl.u32 %s1804, 4
                // While loop
                $region95: #{nn_forward.1} parent=93 // loop_pre_header
                  _
                $region96: #{nn_forward.1} parent=93 // loop_header
                  %s1896 = sphi 0, %s1898
                  %p1897 = scmp.ge.s32.totalorder %s1896, %s1894
                  %s1901 = sphi 0, %s1938
                  %s1902 = sphi %s1797, %s1941
                  %s1903 = sphi %s1808, %s1942
                $region97: #{nn_forward.1} parent=93 // loop_header_branch
                  %1900 = sbr.rel (%p1897) target = $region101
                $region98: #{nn_forward.1} parent=93 // loop_body
                  %v1904 = vld [vmem:[%s1902] sm:$0xff]
                  %1905 = vst [vmem:[%s1903] sm:$0xff] %v1904
                  %v1906 = vld [vmem:[%s1902 + $0x8] sm:$0xff]
                  %1907 = vst [vmem:[%s1903 + $0x8] sm:$0xff] %v1906
                  %v1908 = vld [vmem:[%s1902 + $0x10] sm:$0xff]
                  %1909 = vst [vmem:[%s1903 + $0x10] sm:$0xff] %v1908
                  %v1910 = vld [vmem:[%s1902 + $0x18] sm:$0xff]
                  %1911 = vst [vmem:[%s1903 + $0x18] sm:$0xff] %v1910
                  %v1912 = vld [vmem:[%s1902 + $0x20] sm:$0xff]
                  %1913 = vst [vmem:[%s1903 + $0x20] sm:$0xff] %v1912
                  %v1914 = vld [vmem:[%s1902 + $0x28] sm:$0xff]
                  %1915 = vst [vmem:[%s1903 + $0x28] sm:$0xff] %v1914
                  %v1916 = vld [vmem:[%s1902 + $0x30] sm:$0xff]
                  %1917 = vst [vmem:[%s1903 + $0x30] sm:$0xff] %v1916
                  %v1918 = vld [vmem:[%s1902 + $0x38] sm:$0xff]
                  %1919 = vst [vmem:[%s1903 + $0x38] sm:$0xff] %v1918
                  %v1920 = vld [vmem:[%s1902 + $0x40] sm:$0xff]
                  %1921 = vst [vmem:[%s1903 + $0x40] sm:$0xff] %v1920
                  %v1922 = vld [vmem:[%s1902 + $0x48] sm:$0xff]
                  %1923 = vst [vmem:[%s1903 + $0x48] sm:$0xff] %v1922
                  %v1924 = vld [vmem:[%s1902 + $0x50] sm:$0xff]
                  %1925 = vst [vmem:[%s1903 + $0x50] sm:$0xff] %v1924
                  %v1926 = vld [vmem:[%s1902 + $0x58] sm:$0xff]
                  %1927 = vst [vmem:[%s1903 + $0x58] sm:$0xff] %v1926
                  %v1928 = vld [vmem:[%s1902 + $0x60] sm:$0xff]
                  %1929 = vst [vmem:[%s1903 + $0x60] sm:$0xff] %v1928
                  %v1930 = vld [vmem:[%s1902 + $0x68] sm:$0xff]
                  %1931 = vst [vmem:[%s1903 + $0x68] sm:$0xff] %v1930
                  %v1932 = vld [vmem:[%s1902 + $0x70] sm:$0xff]
                  %1933 = vst [vmem:[%s1903 + $0x70] sm:$0xff] %v1932
                  %v1934 = vld [vmem:[%s1902 + $0x78] sm:$0xff]
                  %1935 = vst [vmem:[%s1903 + $0x78] sm:$0xff] %v1934
                  %s1936 = sadd.s32 1, %s1901
                  %p1937 = scmp.ge.s32.totalorder %s1936, %s1894
                  %s1938 = scalar_select %p1937, 0, %s1936
                  %s1939 = smul.u32 %s1938, 128
                  %s1940 = smul.u32 %s1938, 128
                  %s1941 = scalar_lea.vmem %s1797, %s1939 [#allocation5]
                  %s1942 = scalar_lea.vmem %s1808, %s1940
                $region99: #{nn_forward.1} parent=93 // loop_footer
                  %s1898 = sadd.s32 %s1896, 1
                $region100: #{nn_forward.1} parent=93 // loop_footer_branch
                  %1895 = sbr.rel target = $region96
                $region101: #{nn_forward.1} parent=93 // loop_exit
                  _
                %s1943 = sshrl.u32 %s1804, 4
                %s1944 = sand.u32 %s1804, 15
                %s1945 = smul.u32 %s1943, 16
                %s1946 = smul.u32 8, %s1945
                %s1947 = scalar_lea.vmem %s1797, %s1946 [#allocation5]
                %s1948 = smul.u32 8, %s1945
                %s1949 = scalar_lea.vmem %s1808, %s1948
                // While loop
                $region102: #{nn_forward.1} parent=93 // loop_pre_header
                  _
                $region103: #{nn_forward.1} parent=93 // loop_header
                  %s1951 = sphi 0, %s1953
                  %p1952 = scmp.ge.s32.totalorder %s1951, %s1944
                  %s1956 = sphi 0, %s1963
                  %s1957 = sphi %s1947, %s1966
                  %s1958 = sphi %s1949, %s1967
                $region104: #{nn_forward.1} parent=93 // loop_header_branch
                  %1955 = sbr.rel (%p1952) target = $region108
                $region105: #{nn_forward.1} parent=93 // loop_body
                  %v1959 = vld [vmem:[%s1957] sm:$0xff]
                  %1960 = vst [vmem:[%s1958] sm:$0xff] %v1959
                  %s1961 = sadd.s32 1, %s1956
                  %p1962 = scmp.ge.s32.totalorder %s1961, %s1944
                  %s1963 = scalar_select %p1962, 0, %s1961
                  %s1964 = smul.u32 %s1963, 8
                  %s1965 = smul.u32 %s1963, 8
                  %s1966 = scalar_lea.vmem %s1947, %s1964 [#allocation5]
                  %s1967 = scalar_lea.vmem %s1949, %s1965
                $region106: #{nn_forward.1} parent=93 // loop_footer
                  %s1953 = sadd.s32 %s1951, 1
                $region107: #{nn_forward.1} parent=93 // loop_footer_branch
                  %1950 = sbr.rel target = $region103
                $region108: #{nn_forward.1} parent=93 // loop_exit
                  _
              $region94: #{nn_forward.1} parent=71 // pred_fallthru
                _
              // Predicated region
              $region109: #{nn_forward.1} parent=71 // pred_check
                _
              $region110: #{nn_forward.1} parent=71 // pred_check_branch
                %1969 = sbr.rel target = $region112
              $region111: #{nn_forward.1} parent=71 // pred_region
                _
              $region112: #{nn_forward.1} parent=71 // pred_fallthru
                _
            $region72: #{nn_forward.1} parent=67 // pred_fallthru
              _
            // Predicated region
            $region73: #{nn_forward.1} parent=67 // pred_check
              _
            $region74: #{nn_forward.1} parent=67 // pred_check_branch
              %1815 = sbr.rel target = $region76
            $region75: #{nn_forward.1} parent=67 // pred_region
              %s1817 = ssub.s32 256, 1
              %s1818 = sshrl.u32 %s1804, 4
              // While loop
              $region77: #{nn_forward.1} parent=75 // loop_pre_header
                _
              $region78: #{nn_forward.1} parent=75 // loop_header
                %s1820 = sphi 0, %s1822
                %p1821 = scmp.ge.s32.totalorder %s1820, %s1818
                %s1825 = sphi 0, %s1862
                %s1826 = sphi %s1797, %s1865
                %s1827 = sphi %s1808, %s1866
              $region79: #{nn_forward.1} parent=75 // loop_header_branch
                %1824 = sbr.rel (%p1821) target = $region83
              $region80: #{nn_forward.1} parent=75 // loop_body
                %v1828 = vld [vmem:[%s1826] sm:%s1817]
                %1829 = vst [vmem:[%s1827] sm:%s1817] %v1828
                %v1830 = vld [vmem:[%s1826 + $0x8] sm:%s1817]
                %1831 = vst [vmem:[%s1827 + $0x8] sm:%s1817] %v1830
                %v1832 = vld [vmem:[%s1826 + $0x10] sm:%s1817]
                %1833 = vst [vmem:[%s1827 + $0x10] sm:%s1817] %v1832
                %v1834 = vld [vmem:[%s1826 + $0x18] sm:%s1817]
                %1835 = vst [vmem:[%s1827 + $0x18] sm:%s1817] %v1834
                %v1836 = vld [vmem:[%s1826 + $0x20] sm:%s1817]
                %1837 = vst [vmem:[%s1827 + $0x20] sm:%s1817] %v1836
                %v1838 = vld [vmem:[%s1826 + $0x28] sm:%s1817]
                %1839 = vst [vmem:[%s1827 + $0x28] sm:%s1817] %v1838
                %v1840 = vld [vmem:[%s1826 + $0x30] sm:%s1817]
                %1841 = vst [vmem:[%s1827 + $0x30] sm:%s1817] %v1840
                %v1842 = vld [vmem:[%s1826 + $0x38] sm:%s1817]
                %1843 = vst [vmem:[%s1827 + $0x38] sm:%s1817] %v1842
                %v1844 = vld [vmem:[%s1826 + $0x40] sm:%s1817]
                %1845 = vst [vmem:[%s1827 + $0x40] sm:%s1817] %v1844
                %v1846 = vld [vmem:[%s1826 + $0x48] sm:%s1817]
                %1847 = vst [vmem:[%s1827 + $0x48] sm:%s1817] %v1846
                %v1848 = vld [vmem:[%s1826 + $0x50] sm:%s1817]
                %1849 = vst [vmem:[%s1827 + $0x50] sm:%s1817] %v1848
                %v1850 = vld [vmem:[%s1826 + $0x58] sm:%s1817]
                %1851 = vst [vmem:[%s1827 + $0x58] sm:%s1817] %v1850
                %v1852 = vld [vmem:[%s1826 + $0x60] sm:%s1817]
                %1853 = vst [vmem:[%s1827 + $0x60] sm:%s1817] %v1852
                %v1854 = vld [vmem:[%s1826 + $0x68] sm:%s1817]
                %1855 = vst [vmem:[%s1827 + $0x68] sm:%s1817] %v1854
                %v1856 = vld [vmem:[%s1826 + $0x70] sm:%s1817]
                %1857 = vst [vmem:[%s1827 + $0x70] sm:%s1817] %v1856
                %v1858 = vld [vmem:[%s1826 + $0x78] sm:%s1817]
                %1859 = vst [vmem:[%s1827 + $0x78] sm:%s1817] %v1858
                %s1860 = sadd.s32 1, %s1825
                %p1861 = scmp.ge.s32.totalorder %s1860, %s1818
                %s1862 = scalar_select %p1861, 0, %s1860
                %s1863 = smul.u32 %s1862, 128
                %s1864 = smul.u32 %s1862, 128
                %s1865 = scalar_lea.vmem %s1797, %s1863 [#allocation5]
                %s1866 = scalar_lea.vmem %s1808, %s1864
              $region81: #{nn_forward.1} parent=75 // loop_footer
                %s1822 = sadd.s32 %s1820, 1
              $region82: #{nn_forward.1} parent=75 // loop_footer_branch
                %1819 = sbr.rel target = $region78
              $region83: #{nn_forward.1} parent=75 // loop_exit
                _
              %s1867 = sshrl.u32 %s1804, 4
              %s1868 = sand.u32 %s1804, 15
              %s1869 = smul.u32 %s1867, 16
              %s1870 = smul.u32 8, %s1869
              %s1871 = scalar_lea.vmem %s1797, %s1870 [#allocation5]
              %s1872 = smul.u32 8, %s1869
              %s1873 = scalar_lea.vmem %s1808, %s1872
              // While loop
              $region84: #{nn_forward.1} parent=75 // loop_pre_header
                _
              $region85: #{nn_forward.1} parent=75 // loop_header
                %s1875 = sphi 0, %s1877
                %p1876 = scmp.ge.s32.totalorder %s1875, %s1868
                %s1880 = sphi 0, %s1887
                %s1881 = sphi %s1871, %s1890
                %s1882 = sphi %s1873, %s1891
              $region86: #{nn_forward.1} parent=75 // loop_header_branch
                %1879 = sbr.rel (%p1876) target = $region90
              $region87: #{nn_forward.1} parent=75 // loop_body
                %v1883 = vld [vmem:[%s1881] sm:%s1817]
                %1884 = vst [vmem:[%s1882] sm:%s1817] %v1883
                %s1885 = sadd.s32 1, %s1880
                %p1886 = scmp.ge.s32.totalorder %s1885, %s1868
                %s1887 = scalar_select %p1886, 0, %s1885
                %s1888 = smul.u32 %s1887, 8
                %s1889 = smul.u32 %s1887, 8
                %s1890 = scalar_lea.vmem %s1871, %s1888 [#allocation5]
                %s1891 = scalar_lea.vmem %s1873, %s1889
              $region88: #{nn_forward.1} parent=75 // loop_footer
                %s1877 = sadd.s32 %s1875, 1
              $region89: #{nn_forward.1} parent=75 // loop_footer_branch
                %1874 = sbr.rel target = $region85
              $region90: #{nn_forward.1} parent=75 // loop_exit
                _
            $region76: #{nn_forward.1} parent=67 // pred_fallthru
              _
          $region68: #{nn_forward.1} parent=63 // pred_fallthru
            _
          %1970 = vnop
        $region64: #{nn_forward.1} parent=55 // pred_fallthru
          _
      $region56: #{nn_forward.1} parent=5 // pred_fallthru
        _
      %p1971 = scmp.le.s32.totalorder 2, %s18
      // Predicated region
      $region113: #{nn_forward.1} parent=5 // pred_check
        %p1972 = pneg %p1971
      $region114: #{nn_forward.1} parent=5 // pred_check_branch
        %1974 = sbr.rel (%p1972) target = $region116
      $region115: #{nn_forward.1} parent=5 // pred_region
        %s1975 = ssub.s32 %s18, 2
        // Predicated region
        $region117: #{nn_forward.1} parent=115 // pred_check
          %p1976 = pneg %p241
        $region118: #{nn_forward.1} parent=115 // pred_check_branch
          %1978 = sbr.rel (%p1976) target = $region120
        $region119: #{nn_forward.1} parent=115 // pred_region
          %s1979 = sand.u32 %s226, 1
          %s1980 = sand.u32 %s226, 1
          %s1981 = smul.addr %s1980, 128
          %s1982 = scalar_lea.vmem [#allocation5], %s1981
        $region120: #{nn_forward.1} parent=115 // pred_fallthru
          _
      $region116: #{nn_forward.1} parent=5 // pred_fallthru
        _
    $region6: #{nn_forward.1} parent=1 // loop_footer
      %s22 = sadd.s32 1, %s18
    $region7: #{nn_forward.1} parent=1 // loop_footer_branch
      %17 = sbr.rel target = $region3
    $region8: #{nn_forward.1} parent=1 // loop_exit
      _
    %1983 = vsyncpa [#allocation4], 1
    %s1984 = scalar_lea.sflag [#allocation4], 1
    %1985 = vsyncpa %s1984, 1

</llo_original>
